<compile_context>
chip_gen: v7x
topology: tpu7x:2x2x1
jax: 0.10.0
libtpu: 0.0.40
codegen_flags: <defaults>
</compile_context>

<pallas_src>
import functools

import jax
import jax.numpy as jnp
from jax import lax
from jax.experimental import pallas as pl
from jax.experimental.pallas import tpu as pltpu

B_BLK = 8      # batch block (sublane multiple); grid shards blocks across TCs
HP = 128       # per-gate lane padding (hidden 16 -> 128 lanes, lane aligned)
LP = 128       # linear-layer lane padding (16 -> 128 lanes)
CP = 128       # class lane padding (4 -> 128 lanes, keeps output stores unmasked)
NEG = -1.0e30  # "minus infinity" bias for padded class lanes (exp underflows to 0)


def stacked_rnn_kernel(xp_ref,    # (T, B_BLK, 4*HP) precomputed x@W_ih + b (gate-padded)
                       whh_ref,   # (HP, 4*HP)       hidden->gates, gate-padded
                       w1_ref,    # (HP, LP)         linear layer (padded rows/cols zero)
                       b1_ref,    # (1, LP)          zero in padded lanes
                       w2_ref,    # (LP, CP)         final layer (padded rows/cols zero)
                       b2_ref,    # (1, CP)          NEG in padded class lanes
                       out_ref,   # (T, B_BLK, CP)   log-softmax outputs (lane-padded)
                       hs_ref):   # (T, B_BLK, HP)   VMEM scratch: hidden states
    T, Bb, _ = xp_ref.shape
    hp = whh_ref.shape[0]

    whh = whh_ref[...]    # hoisted: loaded once per grid step, reused every time step

    # ---- serial LSTM recurrence (only the h @ W_hh matmul + gate math) ----
    def step(t, carry):
        h, c = carry
        gates = xp_ref[t] + jnp.dot(h, whh, preferred_element_type=jnp.float32)
        # PyTorch gate order i, f, g, o; each gate is a full 128-lane block.
        i_g = jax.nn.sigmoid(gates[:, 0 * hp:1 * hp])
        f_g = jax.nn.sigmoid(gates[:, 1 * hp:2 * hp])
        g_g = jnp.tanh(gates[:, 2 * hp:3 * hp])
        o_g = jax.nn.sigmoid(gates[:, 3 * hp:4 * hp])
        c_new = f_g * c + i_g * g_g          # padded lanes stay exactly 0
        h_new = o_g * jnp.tanh(c_new)        # padded lanes stay exactly 0
        hs_ref[t] = h_new
        return (h_new, c_new)

    h0 = jnp.zeros((Bb, hp), jnp.float32)
    lax.fori_loop(0, T, step, (h0, h0), unroll=True)

    # ---- batched post-recurrence head (off the serial critical path) ----
    hs = hs_ref[...].reshape(T * Bb, hp)                               # (T*B, HP)
    z = jnp.tanh(jnp.dot(hs, w1_ref[...],
                         preferred_element_type=jnp.float32) + b1_ref[...])
    logits = jnp.dot(z, w2_ref[...],
                     preferred_element_type=jnp.float32) + b2_ref[...]  # (T*B, CP)
    # Padded class lanes carry logit NEG -> exp underflows to exactly 0, so the
    # log-softmax over the real lanes is exact.
    m = jnp.max(logits, axis=-1, keepdims=True)
    lse = m + jnp.log(jnp.sum(jnp.exp(logits - m), axis=-1, keepdims=True))
    out_ref[...] = (logits - lse).reshape(T, Bb, -1)    # one bulk, unmasked store


@functools.partial(jax.jit, static_argnames=("n_classes",))
def stacked_rnn_forward(x, packed_params, *, n_classes):
    """x: (B, T, F) float32 (batch_first). Returns (B, T, n_classes) log-probs."""
    wih_p, whh_p, b_p, w1_p, b1_p, w2_p, b2_p = packed_params
    B, T, F = x.shape
    G = whh_p.shape[1]          # 4 * HP

    # Pad batch to a sublane multiple so all vector ops / MXU rows are dense.
    B_pad = pl.cdiv(B, B_BLK) * B_BLK
    x_pad = jnp.pad(x, ((0, B_pad - B), (0, 0), (0, 0)))

    # Hoisted input projection, emitted time-major (no separate transpose op):
    # (T, B_pad, 4*HP) = x @ W_ih^T + (b_ih + b_hh), gate-padded.
    x_proj = jnp.einsum('btf,fg->tbg', x_pad, wih_p,
                        preferred_element_type=jnp.float32) + b_p

    out_tm = pl.pallas_call(
        stacked_rnn_kernel,
        out_shape=jax.ShapeDtypeStruct((T, B_pad, CP), jnp.float32),
        grid_spec=pltpu.PrefetchScalarGridSpec(
            num_scalar_prefetch=0,
            grid=(B_pad // B_BLK,),
            in_specs=[
                pl.BlockSpec((T, B_BLK, G), lambda b: (0, b, 0)),   # x_proj
                pl.BlockSpec((HP, G),       lambda b: (0, 0)),      # whh
                pl.BlockSpec((HP, LP),      lambda b: (0, 0)),      # w1
                pl.BlockSpec((1, LP),       lambda b: (0, 0)),      # b1
                pl.BlockSpec((LP, CP),      lambda b: (0, 0)),      # w2
                pl.BlockSpec((1, CP),       lambda b: (0, 0)),      # b2
            ],
            out_specs=pl.BlockSpec((T, B_BLK, CP), lambda b: (0, b, 0)),
            scratch_shapes=[pltpu.VMEM((T, B_BLK, HP), jnp.float32)],
        ),
        compiler_params=pltpu.CompilerParams(
            dimension_semantics=("parallel",)),   # batch blocks shard across TCs (v7x)
    )(x_proj, whh_p, w1_p, b1_p, w2_p, b2_p)

    # Small output tensor: transpose back to batch-first, drop batch/class padding.
    return jnp.transpose(out_tm, (1, 0, 2))[:B, :, :n_classes]


def init_params(key, n_features, hidden, lin_dim, n_classes):
    """PyTorch-shaped weights + packed (gate/lane-padded, transposed) kernel params."""
    ks = jax.random.split(key, 8)
    s_rnn = 1.0 / jnp.sqrt(hidden)
    s_lin = 1.0 / jnp.sqrt(hidden)
    s_fin = 1.0 / jnp.sqrt(lin_dim)
    u = lambda k, shape, s: jax.random.uniform(k, shape, jnp.float32, -s, s)

    # nn.LSTM: weight_ih (4H, F), weight_hh (4H, H), biases (4H,)
    w_ih = u(ks[0], (4 * hidden, n_features), s_rnn)
    w_hh = u(ks[1], (4 * hidden, hidden), s_rnn)
    b_ih = u(ks[2], (4 * hidden,), s_rnn)
    b_hh = u(ks[3], (4 * hidden,), s_rnn)
    # nn.Linear(hidden, lin_dim)
    w1 = u(ks[4], (lin_dim, hidden), s_lin)
    b1 = u(ks[5], (lin_dim,), s_lin)
    # nn.Linear(lin_dim, n_classes)
    w2 = u(ks[6], (n_classes, lin_dim), s_fin)
    b2 = u(ks[7], (n_classes,), s_fin)

    raw = (w_ih, w_hh, b_ih, b_hh, w1, b1, w2, b2)

    # Pack: gate k occupies lanes [k*HP, k*HP + hidden); hidden rows padded to HP.
    wih_p = jnp.zeros((n_features, 4 * HP), jnp.float32)
    whh_p = jnp.zeros((HP, 4 * HP), jnp.float32)
    b_p = jnp.zeros((1, 4 * HP), jnp.float32)
    for k in range(4):
        gk = slice(k * hidden, (k + 1) * hidden)
        wih_p = wih_p.at[:, k * HP:k * HP + hidden].set(w_ih[gk, :].T)
        whh_p = whh_p.at[:hidden, k * HP:k * HP + hidden].set(w_hh[gk, :].T)
        b_p = b_p.at[0, k * HP:k * HP + hidden].set(b_ih[gk] + b_hh[gk])

    # Head: lane-pad linear (L -> LP) and classes (C -> CP) so every in-kernel
    # tensor and the output store are full 128-lane vregs (unmasked).
    w1_p = jnp.zeros((HP, LP), jnp.float32).at[:hidden, :lin_dim].set(w1.T)
    b1_p = jnp.zeros((1, LP), jnp.float32).at[0, :lin_dim].set(b1)
    w2_p = jnp.zeros((LP, CP), jnp.float32).at[:lin_dim, :n_classes].set(w2.T)
    b2_p = jnp.full((1, CP), NEG, jnp.float32).at[0, :n_classes].set(b2)

    packed = (wih_p, whh_p, b_p, w1_p, b1_p, w2_p, b2_p)
    return packed, raw


def reference_forward(x, raw_params):
    """Pure-JAX reference using the unpadded PyTorch-shaped weights."""
    w_ih, w_hh, b_ih, b_hh, w1, b1, w2, b2 = raw_params
    B, T, F = x.shape
    H = w_hh.shape[1]
    wih_t, whh_t, b = w_ih.T, w_hh.T, (b_ih + b_hh)[None, :]

    def cell(carry, x_t):
        h, c = carry
        gates = x_t @ wih_t + h @ whh_t + b
        i = jax.nn.sigmoid(gates[:, 0 * H:1 * H])
        f = jax.nn.sigmoid(gates[:, 1 * H:2 * H])
        g = jnp.tanh(gates[:, 2 * H:3 * H])
        o = jax.nn.sigmoid(gates[:, 3 * H:4 * H])
        c_new = f * c + i * g
        h_new = o * jnp.tanh(c_new)
        return (h_new, c_new), h_new

    h0 = jnp.zeros((B, H), jnp.float32)
    _, hs = lax.scan(cell, (h0, h0), jnp.transpose(x, (1, 0, 2)))
    hs = jnp.transpose(hs, (1, 0, 2))                      # (B, T, H)
    z = jnp.tanh(hs @ w1.T + b1)
    logits = z @ w2.T + b2
    return jax.nn.log_softmax(logits, axis=-1)


if __name__ == "__main__":
    B, T, F = 2, 8, 16           # batch, n_samples, n_features
    HIDDEN, LIN, C = 16, 16, 4   # recurrent=[16], linear=[16], 4 classes

    key = jax.random.PRNGKey(0)
    k_x, k_p = jax.random.split(key)
    x = jax.random.normal(k_x, (B, T, F), jnp.float32)
    packed, raw = init_params(k_p, F, HIDDEN, LIN, C)

    out = stacked_rnn_forward(x, packed, n_classes=C)
    jax.block_until_ready(out)

    ref = reference_forward(x, raw)
    assert out.shape == (B, T, C)
    assert jnp.allclose(out, ref, atol=1e-5, rtol=1e-5), "mismatch vs reference"

    print("KERNEL_OK")
</pallas_src>

<mosaic_0001>
module attributes {stable_mosaic.version = 11 : i64} {
  func.func @stacked_rnn_kernel(%arg0: i32, %arg1: memref<8x8x512xf32, #tpu.memory_space<vmem>>, %arg2: memref<128x512xf32, #tpu.memory_space<vmem>>, %arg3: memref<128x128xf32, #tpu.memory_space<vmem>>, %arg4: memref<1x128xf32, #tpu.memory_space<vmem>>, %arg5: memref<128x128xf32, #tpu.memory_space<vmem>>, %arg6: memref<1x128xf32, #tpu.memory_space<vmem>>, %arg7: memref<8x8x128xf32, #tpu.memory_space<vmem>>, %arg8: memref<8x8x128xf32, #tpu.memory_space<vmem>>) attributes {dimension_semantics = [#tpu.dimension_semantics<parallel>], iteration_bounds = array<i64: 1>, scalar_prefetch = 0 : i64, scratch_operands = 1 : i64, tpu.core_type = #tpu.core_type<tc>, window_params = [{transform_indices = @transform_0, window_bounds = array<i64: 8, 8, 512>}, {pipeline_mode = #tpu.pipeline_mode<synchronous>, transform_indices = @transform_1, window_bounds = array<i64: 128, 512>}, {pipeline_mode = #tpu.pipeline_mode<synchronous>, transform_indices = @transform_2, window_bounds = array<i64: 128, 128>}, {pipeline_mode = #tpu.pipeline_mode<synchronous>, transform_indices = @transform_3, window_bounds = array<i64: 1, 128>}, {pipeline_mode = #tpu.pipeline_mode<synchronous>, transform_indices = @transform_4, window_bounds = array<i64: 128, 128>}, {pipeline_mode = #tpu.pipeline_mode<synchronous>, transform_indices = @transform_5, window_bounds = array<i64: 1, 128>}, {transform_indices = @transform_6, window_bounds = array<i64: 8, 8, 128>}]} {
    %c0 = arith.constant 0 : index
    %c0_0 = arith.constant 0 : index
    %0 = vector.load %arg2[%c0, %c0_0] : memref<128x512xf32, #tpu.memory_space<vmem>>, vector<128x512xf32>
    %cst = arith.constant 0.000000e+00 : f32
    %1 = vector.broadcast %cst : f32 to vector<8x128xf32>
    %c0_i32 = arith.constant 0 : i32
    %2 = arith.index_cast %c0_i32 : i32 to index
    %c0_1 = arith.constant 0 : index
    %c0_2 = arith.constant 0 : index
    %3 = vector.load %arg1[%2, %c0_1, %c0_2] : memref<8x8x512xf32, #tpu.memory_space<vmem>>, vector<1x8x512xf32>
    %4 = vector.shape_cast %3 : vector<1x8x512xf32> to vector<8x512xf32>
    %cst_3 = arith.constant dense<0.000000e+00> : vector<8x512xf32>
    %5 = tpu.matmul %1, %0, %cst_3 {dimension_numbers = #tpu.dot_dimension_numbers<[1], [0], [0], [1], [0, 0, 1, 1], [], []>} : vector<8x128xf32>, vector<128x512xf32>, vector<8x512xf32> -> vector<8x512xf32>
    %6 = arith.addf %4, %5 : vector<8x512xf32>
    %7 = vector.extract_strided_slice %6 {offsets = [0, 0], sizes = [8, 128], strides = [1, 1]} : vector<8x512xf32> to vector<8x128xf32>
    %8 = arith.negf %7 : vector<8x128xf32>
    %9 = math.exp %8 : vector<8x128xf32>
    %cst_4 = arith.constant 1.000000e+00 : f32
    %10 = vector.broadcast %cst_4 : f32 to vector<8x128xf32>
    %11 = arith.addf %10, %9 : vector<8x128xf32>
    %12 = arith.divf %10, %11 : vector<8x128xf32>
    %13 = vector.extract_strided_slice %6 {offsets = [0, 128], sizes = [8, 128], strides = [1, 1]} : vector<8x512xf32> to vector<8x128xf32>
    %14 = arith.negf %13 : vector<8x128xf32>
    %15 = math.exp %14 : vector<8x128xf32>
    %cst_5 = arith.constant 1.000000e+00 : f32
    %16 = vector.broadcast %cst_5 : f32 to vector<8x128xf32>
    %17 = arith.addf %16, %15 : vector<8x128xf32>
    %18 = arith.divf %16, %17 : vector<8x128xf32>
    %19 = vector.extract_strided_slice %6 {offsets = [0, 256], sizes = [8, 128], strides = [1, 1]} : vector<8x512xf32> to vector<8x128xf32>
    %20 = math.tanh %19 : vector<8x128xf32>
    %21 = vector.extract_strided_slice %6 {offsets = [0, 384], sizes = [8, 128], strides = [1, 1]} : vector<8x512xf32> to vector<8x128xf32>
    %22 = arith.negf %21 : vector<8x128xf32>
    %23 = math.exp %22 : vector<8x128xf32>
    %cst_6 = arith.constant 1.000000e+00 : f32
    %24 = vector.broadcast %cst_6 : f32 to vector<8x128xf32>
    %25 = arith.addf %24, %23 : vector<8x128xf32>
    %26 = arith.divf %24, %25 : vector<8x128xf32>
    %27 = arith.mulf %18, %1 : vector<8x128xf32>
    %28 = arith.mulf %12, %20 : vector<8x128xf32>
    %29 = arith.addf %27, %28 : vector<8x128xf32>
    %30 = math.tanh %29 : vector<8x128xf32>
    %31 = arith.mulf %26, %30 : vector<8x128xf32>
    %32 = arith.index_cast %c0_i32 : i32 to index
    %c0_7 = arith.constant 0 : index
    %c0_8 = arith.constant 0 : index
    %33 = vector.load %arg8[%32, %c0_7, %c0_8] : memref<8x8x128xf32, #tpu.memory_space<vmem>>, vector<1x8x128xf32>
    %34 = vector.shape_cast %33 : vector<1x8x128xf32> to vector<8x128xf32>
    %35 = vector.shape_cast %31 : vector<8x128xf32> to vector<1x8x128xf32>
    tpu.vector_store %arg8[%32, %c0_7, %c0_8], %35 {strides = array<i32>} : memref<8x8x128xf32, #tpu.memory_space<vmem>>, vector<1x8x128xf32>,
    %c1_i32 = arith.constant 1 : i32
    %36 = arith.index_cast %c1_i32 : i32 to index
    %c0_9 = arith.constant 0 : index
    %c0_10 = arith.constant 0 : index
    %37 = vector.load %arg1[%36, %c0_9, %c0_10] : memref<8x8x512xf32, #tpu.memory_space<vmem>>, vector<1x8x512xf32>
    %38 = vector.shape_cast %37 : vector<1x8x512xf32> to vector<8x512xf32>
    %cst_11 = arith.constant dense<0.000000e+00> : vector<8x512xf32>
    %39 = tpu.matmul %31, %0, %cst_11 {dimension_numbers = #tpu.dot_dimension_numbers<[1], [0], [0], [1], [0, 0, 1, 1], [], []>} : vector<8x128xf32>, vector<128x512xf32>, vector<8x512xf32> -> vector<8x512xf32>
    %40 = arith.addf %38, %39 : vector<8x512xf32>
    %41 = vector.extract_strided_slice %40 {offsets = [0, 0], sizes = [8, 128], strides = [1, 1]} : vector<8x512xf32> to vector<8x128xf32>
    %42 = arith.negf %41 : vector<8x128xf32>
    %43 = math.exp %42 : vector<8x128xf32>
    %cst_12 = arith.constant 1.000000e+00 : f32
    %44 = vector.broadcast %cst_12 : f32 to vector<8x128xf32>
    %45 = arith.addf %44, %43 : vector<8x128xf32>
    %46 = arith.divf %44, %45 : vector<8x128xf32>
    %47 = vector.extract_strided_slice %40 {offsets = [0, 128], sizes = [8, 128], strides = [1, 1]} : vector<8x512xf32> to vector<8x128xf32>
    %48 = arith.negf %47 : vector<8x128xf32>
    %49 = math.exp %48 : vector<8x128xf32>
    %cst_13 = arith.constant 1.000000e+00 : f32
    %50 = vector.broadcast %cst_13 : f32 to vector<8x128xf32>
    %51 = arith.addf %50, %49 : vector<8x128xf32>
    %52 = arith.divf %50, %51 : vector<8x128xf32>
    %53 = vector.extract_strided_slice %40 {offsets = [0, 256], sizes = [8, 128], strides = [1, 1]} : vector<8x512xf32> to vector<8x128xf32>
    %54 = math.tanh %53 : vector<8x128xf32>
    %55 = vector.extract_strided_slice %40 {offsets = [0, 384], sizes = [8, 128], strides = [1, 1]} : vector<8x512xf32> to vector<8x128xf32>
    %56 = arith.negf %55 : vector<8x128xf32>
    %57 = math.exp %56 : vector<8x128xf32>
    %cst_14 = arith.constant 1.000000e+00 : f32
    %58 = vector.broadcast %cst_14 : f32 to vector<8x128xf32>
    %59 = arith.addf %58, %57 : vector<8x128xf32>
    %60 = arith.divf %58, %59 : vector<8x128xf32>
    %61 = arith.mulf %52, %29 : vector<8x128xf32>
    %62 = arith.mulf %46, %54 : vector<8x128xf32>
    %63 = arith.addf %61, %62 : vector<8x128xf32>
    %64 = math.tanh %63 : vector<8x128xf32>
    %65 = arith.mulf %60, %64 : vector<8x128xf32>
    %66 = arith.index_cast %c1_i32 : i32 to index
    %c0_15 = arith.constant 0 : index
    %c0_16 = arith.constant 0 : index
    %67 = vector.load %arg8[%66, %c0_15, %c0_16] : memref<8x8x128xf32, #tpu.memory_space<vmem>>, vector<1x8x128xf32>
    %68 = vector.shape_cast %67 : vector<1x8x128xf32> to vector<8x128xf32>
    %69 = vector.shape_cast %65 : vector<8x128xf32> to vector<1x8x128xf32>
    tpu.vector_store %arg8[%66, %c0_15, %c0_16], %69 {strides = array<i32>} : memref<8x8x128xf32, #tpu.memory_space<vmem>>, vector<1x8x128xf32>,
    %c2_i32 = arith.constant 2 : i32
    %70 = arith.index_cast %c2_i32 : i32 to index
    %c0_17 = arith.constant 0 : index
    %c0_18 = arith.constant 0 : index
    %71 = vector.load %arg1[%70, %c0_17, %c0_18] : memref<8x8x512xf32, #tpu.memory_space<vmem>>, vector<1x8x512xf32>
    %72 = vector.shape_cast %71 : vector<1x8x512xf32> to vector<8x512xf32>
    %cst_19 = arith.constant dense<0.000000e+00> : vector<8x512xf32>
    %73 = tpu.matmul %65, %0, %cst_19 {dimension_numbers = #tpu.dot_dimension_numbers<[1], [0], [0], [1], [0, 0, 1, 1], [], []>} : vector<8x128xf32>, vector<128x512xf32>, vector<8x512xf32> -> vector<8x512xf32>
    %74 = arith.addf %72, %73 : vector<8x512xf32>
    %75 = vector.extract_strided_slice %74 {offsets = [0, 0], sizes = [8, 128], strides = [1, 1]} : vector<8x512xf32> to vector<8x128xf32>
    %76 = arith.negf %75 : vector<8x128xf32>
    %77 = math.exp %76 : vector<8x128xf32>
    %cst_20 = arith.constant 1.000000e+00 : f32
    %78 = vector.broadcast %cst_20 : f32 to vector<8x128xf32>
    %79 = arith.addf %78, %77 : vector<8x128xf32>
    %80 = arith.divf %78, %79 : vector<8x128xf32>
    %81 = vector.extract_strided_slice %74 {offsets = [0, 128], sizes = [8, 128], strides = [1, 1]} : vector<8x512xf32> to vector<8x128xf32>
    %82 = arith.negf %81 : vector<8x128xf32>
    %83 = math.exp %82 : vector<8x128xf32>
    %cst_21 = arith.constant 1.000000e+00 : f32
    %84 = vector.broadcast %cst_21 : f32 to vector<8x128xf32>
    %85 = arith.addf %84, %83 : vector<8x128xf32>
    %86 = arith.divf %84, %85 : vector<8x128xf32>
    %87 = vector.extract_strided_slice %74 {offsets = [0, 256], sizes = [8, 128], strides = [1, 1]} : vector<8x512xf32> to vector<8x128xf32>
    %88 = math.tanh %87 : vector<8x128xf32>
    %89 = vector.extract_strided_slice %74 {offsets = [0, 384], sizes = [8, 128], strides = [1, 1]} : vector<8x512xf32> to vector<8x128xf32>
    %90 = arith.negf %89 : vector<8x128xf32>
    %91 = math.exp %90 : vector<8x128xf32>
    %cst_22 = arith.constant 1.000000e+00 : f32
    %92 = vector.broadcast %cst_22 : f32 to vector<8x128xf32>
    %93 = arith.addf %92, %91 : vector<8x128xf32>
    %94 = arith.divf %92, %93 : vector<8x128xf32>
    %95 = arith.mulf %86, %63 : vector<8x128xf32>
    %96 = arith.mulf %80, %88 : vector<8x128xf32>
    %97 = arith.addf %95, %96 : vector<8x128xf32>
    %98 = math.tanh %97 : vector<8x128xf32>
    %99 = arith.mulf %94, %98 : vector<8x128xf32>
    %100 = arith.index_cast %c2_i32 : i32 to index
    %c0_23 = arith.constant 0 : index
    %c0_24 = arith.constant 0 : index
    %101 = vector.load %arg8[%100, %c0_23, %c0_24] : memref<8x8x128xf32, #tpu.memory_space<vmem>>, vector<1x8x128xf32>
    %102 = vector.shape_cast %101 : vector<1x8x128xf32> to vector<8x128xf32>
    %103 = vector.shape_cast %99 : vector<8x128xf32> to vector<1x8x128xf32>
    tpu.vector_store %arg8[%100, %c0_23, %c0_24], %103 {strides = array<i32>} : memref<8x8x128xf32, #tpu.memory_space<vmem>>, vector<1x8x128xf32>,
    %c3_i32 = arith.constant 3 : i32
    %104 = arith.index_cast %c3_i32 : i32 to index
    %c0_25 = arith.constant 0 : index
    %c0_26 = arith.constant 0 : index
    %105 = vector.load %arg1[%104, %c0_25, %c0_26] : memref<8x8x512xf32, #tpu.memory_space<vmem>>, vector<1x8x512xf32>
    %106 = vector.shape_cast %105 : vector<1x8x512xf32> to vector<8x512xf32>
    %cst_27 = arith.constant dense<0.000000e+00> : vector<8x512xf32>
    %107 = tpu.matmul %99, %0, %cst_27 {dimension_numbers = #tpu.dot_dimension_numbers<[1], [0], [0], [1], [0, 0, 1, 1], [], []>} : vector<8x128xf32>, vector<128x512xf32>, vector<8x512xf32> -> vector<8x512xf32>
    %108 = arith.addf %106, %107 : vector<8x512xf32>
    %109 = vector.extract_strided_slice %108 {offsets = [0, 0], sizes = [8, 128], strides = [1, 1]} : vector<8x512xf32> to vector<8x128xf32>
    %110 = arith.negf %109 : vector<8x128xf32>
    %111 = math.exp %110 : vector<8x128xf32>
    %cst_28 = arith.constant 1.000000e+00 : f32
    %112 = vector.broadcast %cst_28 : f32 to vector<8x128xf32>
    %113 = arith.addf %112, %111 : vector<8x128xf32>
    %114 = arith.divf %112, %113 : vector<8x128xf32>
    %115 = vector.extract_strided_slice %108 {offsets = [0, 128], sizes = [8, 128], strides = [1, 1]} : vector<8x512xf32> to vector<8x128xf32>
    %116 = arith.negf %115 : vector<8x128xf32>
    %117 = math.exp %116 : vector<8x128xf32>
    %cst_29 = arith.constant 1.000000e+00 : f32
    %118 = vector.broadcast %cst_29 : f32 to vector<8x128xf32>
    %119 = arith.addf %118, %117 : vector<8x128xf32>
    %120 = arith.divf %118, %119 : vector<8x128xf32>
    %121 = vector.extract_strided_slice %108 {offsets = [0, 256], sizes = [8, 128], strides = [1, 1]} : vector<8x512xf32> to vector<8x128xf32>
    %122 = math.tanh %121 : vector<8x128xf32>
    %123 = vector.extract_strided_slice %108 {offsets = [0, 384], sizes = [8, 128], strides = [1, 1]} : vector<8x512xf32> to vector<8x128xf32>
    %124 = arith.negf %123 : vector<8x128xf32>
    %125 = math.exp %124 : vector<8x128xf32>
    %cst_30 = arith.constant 1.000000e+00 : f32
    %126 = vector.broadcast %cst_30 : f32 to vector<8x128xf32>
    %127 = arith.addf %126, %125 : vector<8x128xf32>
    %128 = arith.divf %126, %127 : vector<8x128xf32>
    %129 = arith.mulf %120, %97 : vector<8x128xf32>
    %130 = arith.mulf %114, %122 : vector<8x128xf32>
    %131 = arith.addf %129, %130 : vector<8x128xf32>
    %132 = math.tanh %131 : vector<8x128xf32>
    %133 = arith.mulf %128, %132 : vector<8x128xf32>
    %134 = arith.index_cast %c3_i32 : i32 to index
    %c0_31 = arith.constant 0 : index
    %c0_32 = arith.constant 0 : index
    %135 = vector.load %arg8[%134, %c0_31, %c0_32] : memref<8x8x128xf32, #tpu.memory_space<vmem>>, vector<1x8x128xf32>
    %136 = vector.shape_cast %135 : vector<1x8x128xf32> to vector<8x128xf32>
    %137 = vector.shape_cast %133 : vector<8x128xf32> to vector<1x8x128xf32>
    tpu.vector_store %arg8[%134, %c0_31, %c0_32], %137 {strides = array<i32>} : memref<8x8x128xf32, #tpu.memory_space<vmem>>, vector<1x8x128xf32>,
    %c4_i32 = arith.constant 4 : i32
    %138 = arith.index_cast %c4_i32 : i32 to index
    %c0_33 = arith.constant 0 : index
    %c0_34 = arith.constant 0 : index
    %139 = vector.load %arg1[%138, %c0_33, %c0_34] : memref<8x8x512xf32, #tpu.memory_space<vmem>>, vector<1x8x512xf32>
    %140 = vector.shape_cast %139 : vector<1x8x512xf32> to vector<8x512xf32>
    %cst_35 = arith.constant dense<0.000000e+00> : vector<8x512xf32>
    %141 = tpu.matmul %133, %0, %cst_35 {dimension_numbers = #tpu.dot_dimension_numbers<[1], [0], [0], [1], [0, 0, 1, 1], [], []>} : vector<8x128xf32>, vector<128x512xf32>, vector<8x512xf32> -> vector<8x512xf32>
    %142 = arith.addf %140, %141 : vector<8x512xf32>
    %143 = vector.extract_strided_slice %142 {offsets = [0, 0], sizes = [8, 128], strides = [1, 1]} : vector<8x512xf32> to vector<8x128xf32>
    %144 = arith.negf %143 : vector<8x128xf32>
    %145 = math.exp %144 : vector<8x128xf32>
    %cst_36 = arith.constant 1.000000e+00 : f32
    %146 = vector.broadcast %cst_36 : f32 to vector<8x128xf32>
    %147 = arith.addf %146, %145 : vector<8x128xf32>
    %148 = arith.divf %146, %147 : vector<8x128xf32>
    %149 = vector.extract_strided_slice %142 {offsets = [0, 128], sizes = [8, 128], strides = [1, 1]} : vector<8x512xf32> to vector<8x128xf32>
    %150 = arith.negf %149 : vector<8x128xf32>
    %151 = math.exp %150 : vector<8x128xf32>
    %cst_37 = arith.constant 1.000000e+00 : f32
    %152 = vector.broadcast %cst_37 : f32 to vector<8x128xf32>
    %153 = arith.addf %152, %151 : vector<8x128xf32>
    %154 = arith.divf %152, %153 : vector<8x128xf32>
    %155 = vector.extract_strided_slice %142 {offsets = [0, 256], sizes = [8, 128], strides = [1, 1]} : vector<8x512xf32> to vector<8x128xf32>
    %156 = math.tanh %155 : vector<8x128xf32>
    %157 = vector.extract_strided_slice %142 {offsets = [0, 384], sizes = [8, 128], strides = [1, 1]} : vector<8x512xf32> to vector<8x128xf32>
    %158 = arith.negf %157 : vector<8x128xf32>
    %159 = math.exp %158 : vector<8x128xf32>
    %cst_38 = arith.constant 1.000000e+00 : f32
    %160 = vector.broadcast %cst_38 : f32 to vector<8x128xf32>
    %161 = arith.addf %160, %159 : vector<8x128xf32>
    %162 = arith.divf %160, %161 : vector<8x128xf32>
    %163 = arith.mulf %154, %131 : vector<8x128xf32>
    %164 = arith.mulf %148, %156 : vector<8x128xf32>
    %165 = arith.addf %163, %164 : vector<8x128xf32>
    %166 = math.tanh %165 : vector<8x128xf32>
    %167 = arith.mulf %162, %166 : vector<8x128xf32>
    %168 = arith.index_cast %c4_i32 : i32 to index
    %c0_39 = arith.constant 0 : index
    %c0_40 = arith.constant 0 : index
    %169 = vector.load %arg8[%168, %c0_39, %c0_40] : memref<8x8x128xf32, #tpu.memory_space<vmem>>, vector<1x8x128xf32>
    %170 = vector.shape_cast %169 : vector<1x8x128xf32> to vector<8x128xf32>
    %171 = vector.shape_cast %167 : vector<8x128xf32> to vector<1x8x128xf32>
    tpu.vector_store %arg8[%168, %c0_39, %c0_40], %171 {strides = array<i32>} : memref<8x8x128xf32, #tpu.memory_space<vmem>>, vector<1x8x128xf32>,
    %c5_i32 = arith.constant 5 : i32
    %172 = arith.index_cast %c5_i32 : i32 to index
    %c0_41 = arith.constant 0 : index
    %c0_42 = arith.constant 0 : index
    %173 = vector.load %arg1[%172, %c0_41, %c0_42] : memref<8x8x512xf32, #tpu.memory_space<vmem>>, vector<1x8x512xf32>
    %174 = vector.shape_cast %173 : vector<1x8x512xf32> to vector<8x512xf32>
    %cst_43 = arith.constant dense<0.000000e+00> : vector<8x512xf32>
    %175 = tpu.matmul %167, %0, %cst_43 {dimension_numbers = #tpu.dot_dimension_numbers<[1], [0], [0], [1], [0, 0, 1, 1], [], []>} : vector<8x128xf32>, vector<128x512xf32>, vector<8x512xf32> -> vector<8x512xf32>
    %176 = arith.addf %174, %175 : vector<8x512xf32>
    %177 = vector.extract_strided_slice %176 {offsets = [0, 0], sizes = [8, 128], strides = [1, 1]} : vector<8x512xf32> to vector<8x128xf32>
    %178 = arith.negf %177 : vector<8x128xf32>
    %179 = math.exp %178 : vector<8x128xf32>
    %cst_44 = arith.constant 1.000000e+00 : f32
    %180 = vector.broadcast %cst_44 : f32 to vector<8x128xf32>
    %181 = arith.addf %180, %179 : vector<8x128xf32>
    %182 = arith.divf %180, %181 : vector<8x128xf32>
    %183 = vector.extract_strided_slice %176 {offsets = [0, 128], sizes = [8, 128], strides = [1, 1]} : vector<8x512xf32> to vector<8x128xf32>
    %184 = arith.negf %183 : vector<8x128xf32>
    %185 = math.exp %184 : vector<8x128xf32>
    %cst_45 = arith.constant 1.000000e+00 : f32
    %186 = vector.broadcast %cst_45 : f32 to vector<8x128xf32>
    %187 = arith.addf %186, %185 : vector<8x128xf32>
    %188 = arith.divf %186, %187 : vector<8x128xf32>
    %189 = vector.extract_strided_slice %176 {offsets = [0, 256], sizes = [8, 128], strides = [1, 1]} : vector<8x512xf32> to vector<8x128xf32>
    %190 = math.tanh %189 : vector<8x128xf32>
    %191 = vector.extract_strided_slice %176 {offsets = [0, 384], sizes = [8, 128], strides = [1, 1]} : vector<8x512xf32> to vector<8x128xf32>
    %192 = arith.negf %191 : vector<8x128xf32>
    %193 = math.exp %192 : vector<8x128xf32>
    %cst_46 = arith.constant 1.000000e+00 : f32
    %194 = vector.broadcast %cst_46 : f32 to vector<8x128xf32>
    %195 = arith.addf %194, %193 : vector<8x128xf32>
    %196 = arith.divf %194, %195 : vector<8x128xf32>
    %197 = arith.mulf %188, %165 : vector<8x128xf32>
    %198 = arith.mulf %182, %190 : vector<8x128xf32>
    %199 = arith.addf %197, %198 : vector<8x128xf32>
    %200 = math.tanh %199 : vector<8x128xf32>
    %201 = arith.mulf %196, %200 : vector<8x128xf32>
    %202 = arith.index_cast %c5_i32 : i32 to index
    %c0_47 = arith.constant 0 : index
    %c0_48 = arith.constant 0 : index
    %203 = vector.load %arg8[%202, %c0_47, %c0_48] : memref<8x8x128xf32, #tpu.memory_space<vmem>>, vector<1x8x128xf32>
    %204 = vector.shape_cast %203 : vector<1x8x128xf32> to vector<8x128xf32>
    %205 = vector.shape_cast %201 : vector<8x128xf32> to vector<1x8x128xf32>
    tpu.vector_store %arg8[%202, %c0_47, %c0_48], %205 {strides = array<i32>} : memref<8x8x128xf32, #tpu.memory_space<vmem>>, vector<1x8x128xf32>,
    %c6_i32 = arith.constant 6 : i32
    %206 = arith.index_cast %c6_i32 : i32 to index
    %c0_49 = arith.constant 0 : index
    %c0_50 = arith.constant 0 : index
    %207 = vector.load %arg1[%206, %c0_49, %c0_50] : memref<8x8x512xf32, #tpu.memory_space<vmem>>, vector<1x8x512xf32>
    %208 = vector.shape_cast %207 : vector<1x8x512xf32> to vector<8x512xf32>
    %cst_51 = arith.constant dense<0.000000e+00> : vector<8x512xf32>
    %209 = tpu.matmul %201, %0, %cst_51 {dimension_numbers = #tpu.dot_dimension_numbers<[1], [0], [0], [1], [0, 0, 1, 1], [], []>} : vector<8x128xf32>, vector<128x512xf32>, vector<8x512xf32> -> vector<8x512xf32>
    %210 = arith.addf %208, %209 : vector<8x512xf32>
    %211 = vector.extract_strided_slice %210 {offsets = [0, 0], sizes = [8, 128], strides = [1, 1]} : vector<8x512xf32> to vector<8x128xf32>
    %212 = arith.negf %211 : vector<8x128xf32>
    %213 = math.exp %212 : vector<8x128xf32>
    %cst_52 = arith.constant 1.000000e+00 : f32
    %214 = vector.broadcast %cst_52 : f32 to vector<8x128xf32>
    %215 = arith.addf %214, %213 : vector<8x128xf32>
    %216 = arith.divf %214, %215 : vector<8x128xf32>
    %217 = vector.extract_strided_slice %210 {offsets = [0, 128], sizes = [8, 128], strides = [1, 1]} : vector<8x512xf32> to vector<8x128xf32>
    %218 = arith.negf %217 : vector<8x128xf32>
    %219 = math.exp %218 : vector<8x128xf32>
    %cst_53 = arith.constant 1.000000e+00 : f32
    %220 = vector.broadcast %cst_53 : f32 to vector<8x128xf32>
    %221 = arith.addf %220, %219 : vector<8x128xf32>
    %222 = arith.divf %220, %221 : vector<8x128xf32>
    %223 = vector.extract_strided_slice %210 {offsets = [0, 256], sizes = [8, 128], strides = [1, 1]} : vector<8x512xf32> to vector<8x128xf32>
    %224 = math.tanh %223 : vector<8x128xf32>
    %225 = vector.extract_strided_slice %210 {offsets = [0, 384], sizes = [8, 128], strides = [1, 1]} : vector<8x512xf32> to vector<8x128xf32>
    %226 = arith.negf %225 : vector<8x128xf32>
    %227 = math.exp %226 : vector<8x128xf32>
    %cst_54 = arith.constant 1.000000e+00 : f32
    %228 = vector.broadcast %cst_54 : f32 to vector<8x128xf32>
    %229 = arith.addf %228, %227 : vector<8x128xf32>
    %230 = arith.divf %228, %229 : vector<8x128xf32>
    %231 = arith.mulf %222, %199 : vector<8x128xf32>
    %232 = arith.mulf %216, %224 : vector<8x128xf32>
    %233 = arith.addf %231, %232 : vector<8x128xf32>
    %234 = math.tanh %233 : vector<8x128xf32>
    %235 = arith.mulf %230, %234 : vector<8x128xf32>
    %236 = arith.index_cast %c6_i32 : i32 to index
    %c0_55 = arith.constant 0 : index
    %c0_56 = arith.constant 0 : index
    %237 = vector.load %arg8[%236, %c0_55, %c0_56] : memref<8x8x128xf32, #tpu.memory_space<vmem>>, vector<1x8x128xf32>
    %238 = vector.shape_cast %237 : vector<1x8x128xf32> to vector<8x128xf32>
    %239 = vector.shape_cast %235 : vector<8x128xf32> to vector<1x8x128xf32>
    tpu.vector_store %arg8[%236, %c0_55, %c0_56], %239 {strides = array<i32>} : memref<8x8x128xf32, #tpu.memory_space<vmem>>, vector<1x8x128xf32>,
    %c7_i32 = arith.constant 7 : i32
    %240 = arith.index_cast %c7_i32 : i32 to index
    %c0_57 = arith.constant 0 : index
    %c0_58 = arith.constant 0 : index
    %241 = vector.load %arg1[%240, %c0_57, %c0_58] : memref<8x8x512xf32, #tpu.memory_space<vmem>>, vector<1x8x512xf32>
    %242 = vector.shape_cast %241 : vector<1x8x512xf32> to vector<8x512xf32>
    %cst_59 = arith.constant dense<0.000000e+00> : vector<8x512xf32>
    %243 = tpu.matmul %235, %0, %cst_59 {dimension_numbers = #tpu.dot_dimension_numbers<[1], [0], [0], [1], [0, 0, 1, 1], [], []>} : vector<8x128xf32>, vector<128x512xf32>, vector<8x512xf32> -> vector<8x512xf32>
    %244 = arith.addf %242, %243 : vector<8x512xf32>
    %245 = vector.extract_strided_slice %244 {offsets = [0, 0], sizes = [8, 128], strides = [1, 1]} : vector<8x512xf32> to vector<8x128xf32>
    %246 = arith.negf %245 : vector<8x128xf32>
    %247 = math.exp %246 : vector<8x128xf32>
    %cst_60 = arith.constant 1.000000e+00 : f32
    %248 = vector.broadcast %cst_60 : f32 to vector<8x128xf32>
    %249 = arith.addf %248, %247 : vector<8x128xf32>
    %250 = arith.divf %248, %249 : vector<8x128xf32>
    %251 = vector.extract_strided_slice %244 {offsets = [0, 128], sizes = [8, 128], strides = [1, 1]} : vector<8x512xf32> to vector<8x128xf32>
    %252 = arith.negf %251 : vector<8x128xf32>
    %253 = math.exp %252 : vector<8x128xf32>
    %cst_61 = arith.constant 1.000000e+00 : f32
    %254 = vector.broadcast %cst_61 : f32 to vector<8x128xf32>
    %255 = arith.addf %254, %253 : vector<8x128xf32>
    %256 = arith.divf %254, %255 : vector<8x128xf32>
    %257 = vector.extract_strided_slice %244 {offsets = [0, 256], sizes = [8, 128], strides = [1, 1]} : vector<8x512xf32> to vector<8x128xf32>
    %258 = math.tanh %257 : vector<8x128xf32>
    %259 = vector.extract_strided_slice %244 {offsets = [0, 384], sizes = [8, 128], strides = [1, 1]} : vector<8x512xf32> to vector<8x128xf32>
    %260 = arith.negf %259 : vector<8x128xf32>
    %261 = math.exp %260 : vector<8x128xf32>
    %cst_62 = arith.constant 1.000000e+00 : f32
    %262 = vector.broadcast %cst_62 : f32 to vector<8x128xf32>
    %263 = arith.addf %262, %261 : vector<8x128xf32>
    %264 = arith.divf %262, %263 : vector<8x128xf32>
    %265 = arith.mulf %256, %233 : vector<8x128xf32>
    %266 = arith.mulf %250, %258 : vector<8x128xf32>
    %267 = arith.addf %265, %266 : vector<8x128xf32>
    %268 = math.tanh %267 : vector<8x128xf32>
    %269 = arith.mulf %264, %268 : vector<8x128xf32>
    %270 = arith.index_cast %c7_i32 : i32 to index
    %c0_63 = arith.constant 0 : index
    %c0_64 = arith.constant 0 : index
    %271 = vector.load %arg8[%270, %c0_63, %c0_64] : memref<8x8x128xf32, #tpu.memory_space<vmem>>, vector<1x8x128xf32>
    %272 = vector.shape_cast %271 : vector<1x8x128xf32> to vector<8x128xf32>
    %273 = vector.shape_cast %269 : vector<8x128xf32> to vector<1x8x128xf32>
    tpu.vector_store %arg8[%270, %c0_63, %c0_64], %273 {strides = array<i32>} : memref<8x8x128xf32, #tpu.memory_space<vmem>>, vector<1x8x128xf32>,
    %c8_i32 = arith.constant 8 : i32
    %c0_65 = arith.constant 0 : index
    %c0_66 = arith.constant 0 : index
    %c0_67 = arith.constant 0 : index
    %274 = vector.load %arg8[%c0_65, %c0_66, %c0_67] : memref<8x8x128xf32, #tpu.memory_space<vmem>>, vector<8x8x128xf32>
    %275 = vector.shape_cast %274 : vector<8x8x128xf32> to vector<64x128xf32>
    %c0_68 = arith.constant 0 : index
    %c0_69 = arith.constant 0 : index
    %276 = vector.load %arg3[%c0_68, %c0_69] : memref<128x128xf32, #tpu.memory_space<vmem>>, vector<128x128xf32>
    %cst_70 = arith.constant dense<0.000000e+00> : vector<64x128xf32>
    %277 = tpu.matmul %275, %276, %cst_70 {dimension_numbers = #tpu.dot_dimension_numbers<[1], [0], [0], [1], [0, 0, 1, 1], [], []>} : vector<64x128xf32>, vector<128x128xf32>, vector<64x128xf32> -> vector<64x128xf32>
    %c0_71 = arith.constant 0 : index
    %c0_72 = arith.constant 0 : index
    %278 = vector.load %arg4[%c0_71, %c0_72] : memref<1x128xf32, #tpu.memory_space<vmem>>, vector<1x128xf32>
    %279 = vector.broadcast %278 : vector<1x128xf32> to vector<64x128xf32>
    %280 = arith.addf %277, %279 : vector<64x128xf32>
    %281 = math.tanh %280 : vector<64x128xf32>
    %c0_73 = arith.constant 0 : index
    %c0_74 = arith.constant 0 : index
    %282 = vector.load %arg5[%c0_73, %c0_74] : memref<128x128xf32, #tpu.memory_space<vmem>>, vector<128x128xf32>
    %cst_75 = arith.constant dense<0.000000e+00> : vector<64x128xf32>
    %283 = tpu.matmul %281, %282, %cst_75 {dimension_numbers = #tpu.dot_dimension_numbers<[1], [0], [0], [1], [0, 0, 1, 1], [], []>} : vector<64x128xf32>, vector<128x128xf32>, vector<64x128xf32> -> vector<64x128xf32>
    %c0_76 = arith.constant 0 : index
    %c0_77 = arith.constant 0 : index
    %284 = vector.load %arg6[%c0_76, %c0_77] : memref<1x128xf32, #tpu.memory_space<vmem>>, vector<1x128xf32>
    %285 = vector.broadcast %284 : vector<1x128xf32> to vector<64x128xf32>
    %286 = arith.addf %283, %285 : vector<64x128xf32>
    %cst_78 = arith.constant dense<0xFF800000> : vector<64xf32>
    %287 = vector.multi_reduction <maximumf>, %286, %cst_78 [1] : vector<64x128xf32> to vector<64xf32>
    %288 = vector.shape_cast %287 : vector<64xf32> to vector<64x1xf32>
    %289 = vector.broadcast %288 : vector<64x1xf32> to vector<64x128xf32>
    %290 = arith.subf %286, %289 : vector<64x128xf32>
    %291 = math.exp %290 : vector<64x128xf32>
    %cst_79 = arith.constant dense<0.000000e+00> : vector<64xf32>
    %292 = vector.multi_reduction <add>, %291, %cst_79 [1] : vector<64x128xf32> to vector<64xf32>
    %293 = vector.shape_cast %292 : vector<64xf32> to vector<64x1xf32>
    %294 = math.log %293 : vector<64x1xf32>
    %295 = arith.addf %288, %294 : vector<64x1xf32>
    %296 = vector.broadcast %295 : vector<64x1xf32> to vector<64x128xf32>
    %297 = arith.subf %286, %296 : vector<64x128xf32>
    %298 = vector.shape_cast %297 : vector<64x128xf32> to vector<8x8x128xf32>
    %c0_80 = arith.constant 0 : index
    %c0_81 = arith.constant 0 : index
    %c0_82 = arith.constant 0 : index
    %299 = vector.load %arg7[%c0_80, %c0_81, %c0_82] : memref<8x8x128xf32, #tpu.memory_space<vmem>>, vector<8x8x128xf32>
    tpu.vector_store %arg7[%c0_80, %c0_81, %c0_82], %298 {strides = array<i32>} : memref<8x8x128xf32, #tpu.memory_space<vmem>>, vector<8x8x128xf32>,
    return
  }
  func.func @transform_0(%arg0: i32) -> (i32, i32, i32) {
    %c0_i32 = arith.constant 0 : i32
    %c0_i32_0 = arith.constant 0 : i32
    %c0_i32_1 = arith.constant 0 : i32
    return %c0_i32, %arg0, %c0_i32_0 : i32, i32, i32
  }
  func.func @transform_1(%arg0: i32) -> (i32, i32) {
    %c0_i32 = arith.constant 0 : i32
    %c0_i32_0 = arith.constant 0 : i32
    %c0_i32_1 = arith.constant 0 : i32
    return %c0_i32, %c0_i32_0 : i32, i32
  }
  func.func @transform_2(%arg0: i32) -> (i32, i32) {
    %c0_i32 = arith.constant 0 : i32
    %c0_i32_0 = arith.constant 0 : i32
    %c0_i32_1 = arith.constant 0 : i32
    return %c0_i32, %c0_i32_0 : i32, i32
  }
  func.func @transform_3(%arg0: i32) -> (i32, i32) {
    %c0_i32 = arith.constant 0 : i32
    %c0_i32_0 = arith.constant 0 : i32
    %c0_i32_1 = arith.constant 0 : i32
    return %c0_i32, %c0_i32_0 : i32, i32
  }
  func.func @transform_4(%arg0: i32) -> (i32, i32) {
    %c0_i32 = arith.constant 0 : i32
    %c0_i32_0 = arith.constant 0 : i32
    %c0_i32_1 = arith.constant 0 : i32
    return %c0_i32, %c0_i32_0 : i32, i32
  }
  func.func @transform_5(%arg0: i32) -> (i32, i32) {
    %c0_i32 = arith.constant 0 : i32
    %c0_i32_0 = arith.constant 0 : i32
    %c0_i32_1 = arith.constant 0 : i32
    return %c0_i32, %c0_i32_0 : i32, i32
  }
  func.func @transform_6(%arg0: i32) -> (i32, i32, i32) {
    %c0_i32 = arith.constant 0 : i32
    %c0_i32_0 = arith.constant 0 : i32
    %c0_i32_1 = arith.constant 0 : i32
    return %c0_i32, %arg0, %c0_i32_0 : i32, i32, i32
  }
}

</mosaic_0001>

<llo_original>
// kernel: stacked_rnn_forward.1
$region0: #{stacked_rnn_forward.1}
  #allocation0 [shape = 'u32[]', space=smem, size = 0x4, offset = 0x4, fixed_abs, tag = 'smem constant byte address 0x4 - core index']
  #allocation1 [shape = 'u32[144,128]{1,0:T(1,128)}', space=vmem, size = 0x12000, scoped, tag = 'internal scratch']
  #allocation2 [shape = 'f32[8,8,128]{2,1,0:T(8,128)}', space=vmem, size = 0x8000, scoped, tag = 'scratch operand']
  %s0 = inlined_call_operand.vmem [shape: f32[8,8,512], index: 0, kind: input, shape index: {}]
  %s1 = inlined_call_operand.hbm [shape: f32[128,512], index: 1, kind: input, shape index: {}]
  %s2 = inlined_call_operand.vmem [shape: f32[128,128], index: 2, kind: input, shape index: {}]
  %s3 = inlined_call_operand.vmem [shape: f32[1,128], index: 3, kind: input, shape index: {}]
  %s4 = inlined_call_operand.vmem [shape: f32[128,128], index: 4, kind: input, shape index: {}]
  %s5 = inlined_call_operand.vmem [shape: f32[1,128], index: 5, kind: input, shape index: {}]
  %s6 = inlined_call_operand.vmem [shape: f32[8,8,128], index: 6, kind: output, shape index: {}]
  %s7 = sld [smem:[#allocation0]]
  $region38: #{stacked_rnn_forward.1} parent=0
    _
  %s9 = ssub.s32 1, %s7
  %s10 = scalar_select 0, %s9, %s7
  $region1: #{stacked_rnn_forward.1} parent=0
    #allocation3 [shape = 'u8[262144]{0}', space=vmem, size = 0x40000, scoped, tag = 'input window, operand 1, single buffered']
    #allocation4 [shape = 's32[1]{0}', space=sflag, size = 0x4, scoped, tag = 'scoped memory for stacked_rnn_forward.1']
    %11 = vsyncpa [#allocation4], 0
    // Predicated region
    $region2: #{stacked_rnn_forward.1} parent=1 // pred_check
      _
    $region3: #{stacked_rnn_forward.1} parent=1 // pred_check_branch
      %13 = sbr.rel (0) target = $region5
    $region4: #{stacked_rnn_forward.1} parent=1 // pred_region
      _
    $region5: #{stacked_rnn_forward.1} parent=1 // pred_fallthru
      _
    // Predicated region
    $region6: #{stacked_rnn_forward.1} parent=1 // pred_check
      _
    $region7: #{stacked_rnn_forward.1} parent=1 // pred_check_branch
      %15 = sbr.rel (0) target = $region9
    $region8: #{stacked_rnn_forward.1} parent=1 // pred_region
      %s17 = ssub.s32 8192, 8192
      %18 = vsyncadd [#allocation4], %s17
      %s19 = sshll.u32 [#allocation3], 4
      %s20 = int_to_ptr.vmem [resolvable:$true] %s19
      %25 = dma.hbm_to_vmem [thread:$0]  %s1, 8192, %s20, [#allocation4], 512, 512, 32
    $region9: #{stacked_rnn_forward.1} parent=1 // pred_fallthru
      _
    // Predicated region
    $region10: #{stacked_rnn_forward.1} parent=1 // pred_check
      _
    $region11: #{stacked_rnn_forward.1} parent=1 // pred_check_branch
      %27 = sbr.rel (0) target = $region13
    $region12: #{stacked_rnn_forward.1} parent=1 // pred_region
      _
    $region13: #{stacked_rnn_forward.1} parent=1 // pred_fallthru
      _
    // Predicated region
    $region14: #{stacked_rnn_forward.1} parent=1 // pred_check
      _
    $region15: #{stacked_rnn_forward.1} parent=1 // pred_check_branch
      %29 = sbr.rel (0) target = $region17
    $region16: #{stacked_rnn_forward.1} parent=1 // pred_region
      _
    $region17: #{stacked_rnn_forward.1} parent=1 // pred_fallthru
      _
    // Predicated region
    $region18: #{stacked_rnn_forward.1} parent=1 // pred_check
      _
    $region19: #{stacked_rnn_forward.1} parent=1 // pred_check_branch
      %31 = sbr.rel (0) target = $region21
    $region20: #{stacked_rnn_forward.1} parent=1 // pred_region
      _
    $region21: #{stacked_rnn_forward.1} parent=1 // pred_fallthru
      _
    // Predicated region
    $region22: #{stacked_rnn_forward.1} parent=1 // pred_check
      _
    $region23: #{stacked_rnn_forward.1} parent=1 // pred_check_branch
      %33 = sbr.rel (0) target = $region25
    $region24: #{stacked_rnn_forward.1} parent=1 // pred_region
      _
    $region25: #{stacked_rnn_forward.1} parent=1 // pred_fallthru
      _
    // Predicated region
    $region26: #{stacked_rnn_forward.1} parent=1 // pred_check
      _
    $region27: #{stacked_rnn_forward.1} parent=1 // pred_check_branch
      %35 = sbr.rel (0) target = $region29
    $region28: #{stacked_rnn_forward.1} parent=1 // pred_region
      %36 = dma.done [#allocation4], 8192
    $region29: #{stacked_rnn_forward.1} parent=1 // pred_fallthru
      _
    %v37 = vld [vmem:[#allocation3] sm:$0xff]
    %v38 = vld [vmem:[#allocation3 + $0x8] sm:$0xff]
    %v39 = vld [vmem:[#allocation3 + $0x10] sm:$0xff]
    %v40 = vld [vmem:[#allocation3 + $0x18] sm:$0xff]
    %v41 = vld [vmem:[#allocation3 + $0x20] sm:$0xff]
    %v42 = vld [vmem:[#allocation3 + $0x28] sm:$0xff]
    %v43 = vld [vmem:[#allocation3 + $0x30] sm:$0xff]
    %v44 = vld [vmem:[#allocation3 + $0x38] sm:$0xff]
    %v45 = vld [vmem:[#allocation3 + $0x40] sm:$0xff]
    %v46 = vld [vmem:[#allocation3 + $0x48] sm:$0xff]
    %v47 = vld [vmem:[#allocation3 + $0x50] sm:$0xff]
    %v48 = vld [vmem:[#allocation3 + $0x58] sm:$0xff]
    %v49 = vld [vmem:[#allocation3 + $0x60] sm:$0xff]
    %v50 = vld [vmem:[#allocation3 + $0x68] sm:$0xff]
    %v51 = vld [vmem:[#allocation3 + $0x70] sm:$0xff]
    %v52 = vld [vmem:[#allocation3 + $0x78] sm:$0xff]
    %v53 = vld [vmem:[#allocation3 + $0x80] sm:$0xff]
    %v54 = vld [vmem:[#allocation3 + $0x88] sm:$0xff]
    %v55 = vld [vmem:[#allocation3 + $0x90] sm:$0xff]
    %v56 = vld [vmem:[#allocation3 + $0x98] sm:$0xff]
    %v57 = vld [vmem:[#allocation3 + $0xa0] sm:$0xff]
    %v58 = vld [vmem:[#allocation3 + $0xa8] sm:$0xff]
    %v59 = vld [vmem:[#allocation3 + $0xb0] sm:$0xff]
    %v60 = vld [vmem:[#allocation3 + $0xb8] sm:$0xff]
    %v61 = vld [vmem:[#allocation3 + $0xc0] sm:$0xff]
    %v62 = vld [vmem:[#allocation3 + $0xc8] sm:$0xff]
    %v63 = vld [vmem:[#allocation3 + $0xd0] sm:$0xff]
    %v64 = vld [vmem:[#allocation3 + $0xd8] sm:$0xff]
    %v65 = vld [vmem:[#allocation3 + $0xe0] sm:$0xff]
    %v66 = vld [vmem:[#allocation3 + $0xe8] sm:$0xff]
    %v67 = vld [vmem:[#allocation3 + $0xf0] sm:$0xff]
    %v68 = vld [vmem:[#allocation3 + $0xf8] sm:$0xff]
    %v69 = vld [vmem:[#allocation3 + $0x100] sm:$0xff]
    %v70 = vld [vmem:[#allocation3 + $0x108] sm:$0xff]
    %v71 = vld [vmem:[#allocation3 + $0x110] sm:$0xff]
    %v72 = vld [vmem:[#allocation3 + $0x118] sm:$0xff]
    %v73 = vld [vmem:[#allocation3 + $0x120] sm:$0xff]
    %v74 = vld [vmem:[#allocation3 + $0x128] sm:$0xff]
    %v75 = vld [vmem:[#allocation3 + $0x130] sm:$0xff]
    %v76 = vld [vmem:[#allocation3 + $0x138] sm:$0xff]
    %v77 = vld [vmem:[#allocation3 + $0x140] sm:$0xff]
    %v78 = vld [vmem:[#allocation3 + $0x148] sm:$0xff]
    %v79 = vld [vmem:[#allocation3 + $0x150] sm:$0xff]
    %v80 = vld [vmem:[#allocation3 + $0x158] sm:$0xff]
    %v81 = vld [vmem:[#allocation3 + $0x160] sm:$0xff]
    %v82 = vld [vmem:[#allocation3 + $0x168] sm:$0xff]
    %v83 = vld [vmem:[#allocation3 + $0x170] sm:$0xff]
    %v84 = vld [vmem:[#allocation3 + $0x178] sm:$0xff]
    %v85 = vld [vmem:[#allocation3 + $0x180] sm:$0xff]
    %v86 = vld [vmem:[#allocation3 + $0x188] sm:$0xff]
    %v87 = vld [vmem:[#allocation3 + $0x190] sm:$0xff]
    %v88 = vld [vmem:[#allocation3 + $0x198] sm:$0xff]
    %v89 = vld [vmem:[#allocation3 + $0x1a0] sm:$0xff]
    %v90 = vld [vmem:[#allocation3 + $0x1a8] sm:$0xff]
    %v91 = vld [vmem:[#allocation3 + $0x1b0] sm:$0xff]
    %v92 = vld [vmem:[#allocation3 + $0x1b8] sm:$0xff]
    %v93 = vld [vmem:[#allocation3 + $0x1c0] sm:$0xff]
    %v94 = vld [vmem:[#allocation3 + $0x1c8] sm:$0xff]
    %v95 = vld [vmem:[#allocation3 + $0x1d0] sm:$0xff]
    %v96 = vld [vmem:[#allocation3 + $0x1d8] sm:$0xff]
    %v97 = vld [vmem:[#allocation3 + $0x1e0] sm:$0xff]
    %v98 = vld [vmem:[#allocation3 + $0x1e8] sm:$0xff]
    %v99 = vld [vmem:[#allocation3 + $0x1f0] sm:$0xff]
    %v100 = vld [vmem:[#allocation3 + $0x1f8] sm:$0xff]
    %v101 = vld [vmem:[%s0] sm:$0xff]
    %v102 = vld [vmem:[%s0 + $0x8] sm:$0xff]
    %v103 = vld [vmem:[%s0 + $0x10] sm:$0xff]
    %v104 = vld [vmem:[%s0 + $0x18] sm:$0xff]
    %105 = vmatprep.subr.mxu0 %v38
    %106 = vmatpush1.msra.mxu0 %v37
    %107 = vmatprep.subr.mxu0 %v42
    %108 = vmatpush1.msra.mxu0 %v41
    %109 = vmatprep.subr.mxu0 %v46
    %110 = vmatpush1.msra.mxu0 %v45
    %111 = vmatprep.subr.mxu0 %v50
    %112 = vmatpush1.msra.mxu0 %v49
    %113 = vmatprep.subr.mxu0 %v54
    %114 = vmatpush1.msra.mxu0 %v53
    %115 = vmatprep.subr.mxu0 %v58
    %116 = vmatpush1.msra.mxu0 %v57
    %117 = vmatprep.subr.mxu0 %v62
    %118 = vmatpush1.msra.mxu0 %v61
    %119 = vmatprep.subr.mxu0 %v66
    %120 = vmatpush1.msra.mxu0 %v65
    %121 = vmatprep.subr.mxu0 %v70
    %122 = vmatpush1.msra.mxu0 %v69
    %123 = vmatprep.subr.mxu0 %v74
    %124 = vmatpush1.msra.mxu0 %v73
    %125 = vmatprep.subr.mxu0 %v78
    %126 = vmatpush1.msra.mxu0 %v77
    %127 = vmatprep.subr.mxu0 %v82
    %128 = vmatpush1.msra.mxu0 %v81
    %129 = vmatprep.subr.mxu0 %v86
    %130 = vmatpush1.msra.mxu0 %v85
    %131 = vmatprep.subr.mxu0 %v90
    %132 = vmatpush1.msra.mxu0 %v89
    %133 = vmatprep.subr.mxu0 %v94
    %134 = vmatpush1.msra.mxu0 %v93
    %135 = vmatprep.subr.mxu0 %v98
    %136 = vmatpush1.msra.mxu0 %v97
    %137 = vmatprep.subr.mxu0 0.0
    %138 = vmatpush1.msra.mxu0 0.0
    %139 = vmatprep.subr.mxu0 0.0
    %140 = vmatpush1.msra.mxu0 0.0
    %141 = vmatprep.subr.mxu0 0.0
    %142 = vmatpush1.msra.mxu0 0.0
    %143 = vmatprep.subr.mxu0 0.0
    %144 = vmatpush1.msra.mxu0 0.0
    %145 = vmatprep.subr.mxu0 0.0
    %146 = vmatpush1.msra.mxu0 0.0
    %147 = vmatprep.subr.mxu0 0.0
    %148 = vmatpush1.msra.mxu0 0.0
    %149 = vmatprep.subr.mxu0 0.0
    %150 = vmatpush1.msra.mxu0 0.0
    %151 = vmatprep.subr.mxu0 0.0
    %152 = vmatpush1.msra.mxu0 0.0
    %153 = vmatprep.subr.mxu0 0.0
    %154 = vmatpush1.msra.mxu0 0.0
    %155 = vmatprep.subr.mxu0 0.0
    %156 = vmatpush1.msra.mxu0 0.0
    %157 = vmatprep.subr.mxu0 0.0
    %158 = vmatpush1.msra.mxu0 0.0
    %159 = vmatprep.subr.mxu0 0.0
    %160 = vmatpush1.msra.mxu0 0.0
    %161 = vmatprep.subr.mxu0 0.0
    %162 = vmatpush1.msra.mxu0 0.0
    %163 = vmatprep.subr.mxu0 0.0
    %164 = vmatpush1.msra.mxu0 0.0
    %165 = vmatprep.subr.mxu0 0.0
    %166 = vmatpush1.msra.mxu0 0.0
    %167 = vmatprep.subr.mxu0 0.0
    %168 = vmatpush1.msra.mxu0 0.0
    %169 = vmatprep.mubr.f32.mxu0 0.0
    %170 = vmatmul.mubr.f32.gmra.mrb[0].mxu0 0.0
    %v171 = vpop.f32.mrb[0].mxu0
    %v172 = vadd.f32 0.0, %v171
    %v173 = vpop.f32.mrb[0].mxu0
    %v174 = vadd.f32 0.0, %v173
    %175 = vdwg.mxu0
    %176 = vmatprep.subr.mxu0 %v40
    %177 = vmatpush1.msra.mxu0 %v39
    %178 = vmatprep.subr.mxu0 %v44
    %179 = vmatpush1.msra.mxu0 %v43
    %180 = vmatprep.subr.mxu0 %v48
    %181 = vmatpush1.msra.mxu0 %v47
    %182 = vmatprep.subr.mxu0 %v52
    %183 = vmatpush1.msra.mxu0 %v51
    %184 = vmatprep.subr.mxu0 %v56
    %185 = vmatpush1.msra.mxu0 %v55
    %186 = vmatprep.subr.mxu0 %v60
    %187 = vmatpush1.msra.mxu0 %v59
    %188 = vmatprep.subr.mxu0 %v64
    %189 = vmatpush1.msra.mxu0 %v63
    %190 = vmatprep.subr.mxu0 %v68
    %191 = vmatpush1.msra.mxu0 %v67
    %192 = vmatprep.subr.mxu0 %v72
    %193 = vmatpush1.msra.mxu0 %v71
    %194 = vmatprep.subr.mxu0 %v76
    %195 = vmatpush1.msra.mxu0 %v75
    %196 = vmatprep.subr.mxu0 %v80
    %197 = vmatpush1.msra.mxu0 %v79
    %198 = vmatprep.subr.mxu0 %v84
    %199 = vmatpush1.msra.mxu0 %v83
    %200 = vmatprep.subr.mxu0 %v88
    %201 = vmatpush1.msra.mxu0 %v87
    %202 = vmatprep.subr.mxu0 %v92
    %203 = vmatpush1.msra.mxu0 %v91
    %204 = vmatprep.subr.mxu0 %v96
    %205 = vmatpush1.msra.mxu0 %v95
    %206 = vmatprep.subr.mxu0 %v100
    %207 = vmatpush1.msra.mxu0 %v99
    %208 = vmatprep.subr.mxu0 0.0
    %209 = vmatpush1.msra.mxu0 0.0
    %210 = vmatprep.subr.mxu0 0.0
    %211 = vmatpush1.msra.mxu0 0.0
    %212 = vmatprep.subr.mxu0 0.0
    %213 = vmatpush1.msra.mxu0 0.0
    %214 = vmatprep.subr.mxu0 0.0
    %215 = vmatpush1.msra.mxu0 0.0
    %216 = vmatprep.subr.mxu0 0.0
    %217 = vmatpush1.msra.mxu0 0.0
    %218 = vmatprep.subr.mxu0 0.0
    %219 = vmatpush1.msra.mxu0 0.0
    %220 = vmatprep.subr.mxu0 0.0
    %221 = vmatpush1.msra.mxu0 0.0
    %222 = vmatprep.subr.mxu0 0.0
    %223 = vmatpush1.msra.mxu0 0.0
    %224 = vmatprep.subr.mxu0 0.0
    %225 = vmatpush1.msra.mxu0 0.0
    %226 = vmatprep.subr.mxu0 0.0
    %227 = vmatpush1.msra.mxu0 0.0
    %228 = vmatprep.subr.mxu0 0.0
    %229 = vmatpush1.msra.mxu0 0.0
    %230 = vmatprep.subr.mxu0 0.0
    %231 = vmatpush1.msra.mxu0 0.0
    %232 = vmatprep.subr.mxu0 0.0
    %233 = vmatpush1.msra.mxu0 0.0
    %234 = vmatprep.subr.mxu0 0.0
    %235 = vmatpush1.msra.mxu0 0.0
    %236 = vmatprep.subr.mxu0 0.0
    %237 = vmatpush1.msra.mxu0 0.0
    %238 = vmatprep.subr.mxu0 0.0
    %239 = vmatpush1.msra.mxu0 0.0
    %240 = vmatprep.mubr.f32.mxu0 0.0
    %241 = vmatmul.mubr.f32.gmra.mrb[0].mxu0 0.0
    %v242 = vpop.f32.mrb[0].mxu0
    %v243 = vadd.f32 0.0, %v242
    %v244 = vpop.f32.mrb[0].mxu0
    %v245 = vadd.f32 0.0, %v244
    %246 = vdwg.mxu0
    %v247 = vadd.f32 %v101, %v172
    %v248 = vadd.f32 %v102, %v174
    %v249 = vadd.f32 %v103, %v243
    %v250 = vadd.f32 %v104, %v245
    %v251 = vxor.u32 %v247, 2147483648
    %v252 = vmul.f32 %v251, 1.442695
    %v253 = vpow.pop %v252
    %v254 = vadd.f32 %v253, 1.0
    %v255 = vrcp.pop %v254
    %v256 = vmul.f32 1.0, %v255
    %v257 = vxor.u32 %v248, 2147483648
    %v258 = vmul.f32 %v257, 1.442695
    %v259 = vpow.pop %v258
    %v260 = vadd.f32 %v259, 1.0
    %v261 = vrcp.pop %v260
    %v262 = vmul.f32 1.0, %v261
    %v263 = vtanh.pop %v249
    %v264 = vxor.u32 %v250, 2147483648
    %v265 = vmul.f32 %v264, 1.442695
    %v266 = vpow.pop %v265
    %v267 = vadd.f32 %v266, 1.0
    %v268 = vrcp.pop %v267
    %v269 = vmul.f32 1.0, %v268
    %v270 = vmul.f32 %v262, 0.0
    %v271 = vmul.f32 %v256, %v263
    %v272 = vadd.f32 %v270, %v271
    %v273 = vtanh.pop %v272
    %v274 = vmul.f32 %v269, %v273
    %275 = vst [vmem:[#allocation2] sm:$0xff] %v274
    %s276 = scalar_lea.vmem %s0, 32
    %v277 = vld [vmem:[%s276] sm:$0xff]
    %v278 = vld [vmem:[%s276 + $0x8] sm:$0xff]
    %v279 = vld [vmem:[%s276 + $0x10] sm:$0xff]
    %v280 = vld [vmem:[%s276 + $0x18] sm:$0xff]
    %281 = vmatprep.subr.mxu0 %v38
    %282 = vmatpush1.msra.mxu0 %v37
    %283 = vmatprep.subr.mxu0 %v42
    %284 = vmatpush1.msra.mxu0 %v41
    %285 = vmatprep.subr.mxu0 %v46
    %286 = vmatpush1.msra.mxu0 %v45
    %287 = vmatprep.subr.mxu0 %v50
    %288 = vmatpush1.msra.mxu0 %v49
    %289 = vmatprep.subr.mxu0 %v54
    %290 = vmatpush1.msra.mxu0 %v53
    %291 = vmatprep.subr.mxu0 %v58
    %292 = vmatpush1.msra.mxu0 %v57
    %293 = vmatprep.subr.mxu0 %v62
    %294 = vmatpush1.msra.mxu0 %v61
    %295 = vmatprep.subr.mxu0 %v66
    %296 = vmatpush1.msra.mxu0 %v65
    %297 = vmatprep.subr.mxu0 %v70
    %298 = vmatpush1.msra.mxu0 %v69
    %299 = vmatprep.subr.mxu0 %v74
    %300 = vmatpush1.msra.mxu0 %v73
    %301 = vmatprep.subr.mxu0 %v78
    %302 = vmatpush1.msra.mxu0 %v77
    %303 = vmatprep.subr.mxu0 %v82
    %304 = vmatpush1.msra.mxu0 %v81
    %305 = vmatprep.subr.mxu0 %v86
    %306 = vmatpush1.msra.mxu0 %v85
    %307 = vmatprep.subr.mxu0 %v90
    %308 = vmatpush1.msra.mxu0 %v89
    %309 = vmatprep.subr.mxu0 %v94
    %310 = vmatpush1.msra.mxu0 %v93
    %311 = vmatprep.subr.mxu0 %v98
    %312 = vmatpush1.msra.mxu0 %v97
    %313 = vmatprep.subr.mxu0 0.0
    %314 = vmatpush1.msra.mxu0 0.0
    %315 = vmatprep.subr.mxu0 0.0
    %316 = vmatpush1.msra.mxu0 0.0
    %317 = vmatprep.subr.mxu0 0.0
    %318 = vmatpush1.msra.mxu0 0.0
    %319 = vmatprep.subr.mxu0 0.0
    %320 = vmatpush1.msra.mxu0 0.0
    %321 = vmatprep.subr.mxu0 0.0
    %322 = vmatpush1.msra.mxu0 0.0
    %323 = vmatprep.subr.mxu0 0.0
    %324 = vmatpush1.msra.mxu0 0.0
    %325 = vmatprep.subr.mxu0 0.0
    %326 = vmatpush1.msra.mxu0 0.0
    %327 = vmatprep.subr.mxu0 0.0
    %328 = vmatpush1.msra.mxu0 0.0
    %329 = vmatprep.subr.mxu0 0.0
    %330 = vmatpush1.msra.mxu0 0.0
    %331 = vmatprep.subr.mxu0 0.0
    %332 = vmatpush1.msra.mxu0 0.0
    %333 = vmatprep.subr.mxu0 0.0
    %334 = vmatpush1.msra.mxu0 0.0
    %335 = vmatprep.subr.mxu0 0.0
    %336 = vmatpush1.msra.mxu0 0.0
    %337 = vmatprep.subr.mxu0 0.0
    %338 = vmatpush1.msra.mxu0 0.0
    %339 = vmatprep.subr.mxu0 0.0
    %340 = vmatpush1.msra.mxu0 0.0
    %341 = vmatprep.subr.mxu0 0.0
    %342 = vmatpush1.msra.mxu0 0.0
    %343 = vmatprep.subr.mxu0 0.0
    %344 = vmatpush1.msra.mxu0 0.0
    %345 = vmatprep.mubr.f32.mxu0 0.0
    %346 = vmatmul.mubr.f32.gmra.mrb[0].mxu0 %v274
    %v347 = vpop.f32.mrb[0].mxu0
    %v348 = vadd.f32 0.0, %v347
    %v349 = vpop.f32.mrb[0].mxu0
    %v350 = vadd.f32 0.0, %v349
    %351 = vdwg.mxu0
    %352 = vmatprep.subr.mxu0 %v40
    %353 = vmatpush1.msra.mxu0 %v39
    %354 = vmatprep.subr.mxu0 %v44
    %355 = vmatpush1.msra.mxu0 %v43
    %356 = vmatprep.subr.mxu0 %v48
    %357 = vmatpush1.msra.mxu0 %v47
    %358 = vmatprep.subr.mxu0 %v52
    %359 = vmatpush1.msra.mxu0 %v51
    %360 = vmatprep.subr.mxu0 %v56
    %361 = vmatpush1.msra.mxu0 %v55
    %362 = vmatprep.subr.mxu0 %v60
    %363 = vmatpush1.msra.mxu0 %v59
    %364 = vmatprep.subr.mxu0 %v64
    %365 = vmatpush1.msra.mxu0 %v63
    %366 = vmatprep.subr.mxu0 %v68
    %367 = vmatpush1.msra.mxu0 %v67
    %368 = vmatprep.subr.mxu0 %v72
    %369 = vmatpush1.msra.mxu0 %v71
    %370 = vmatprep.subr.mxu0 %v76
    %371 = vmatpush1.msra.mxu0 %v75
    %372 = vmatprep.subr.mxu0 %v80
    %373 = vmatpush1.msra.mxu0 %v79
    %374 = vmatprep.subr.mxu0 %v84
    %375 = vmatpush1.msra.mxu0 %v83
    %376 = vmatprep.subr.mxu0 %v88
    %377 = vmatpush1.msra.mxu0 %v87
    %378 = vmatprep.subr.mxu0 %v92
    %379 = vmatpush1.msra.mxu0 %v91
    %380 = vmatprep.subr.mxu0 %v96
    %381 = vmatpush1.msra.mxu0 %v95
    %382 = vmatprep.subr.mxu0 %v100
    %383 = vmatpush1.msra.mxu0 %v99
    %384 = vmatprep.subr.mxu0 0.0
    %385 = vmatpush1.msra.mxu0 0.0
    %386 = vmatprep.subr.mxu0 0.0
    %387 = vmatpush1.msra.mxu0 0.0
    %388 = vmatprep.subr.mxu0 0.0
    %389 = vmatpush1.msra.mxu0 0.0
    %390 = vmatprep.subr.mxu0 0.0
    %391 = vmatpush1.msra.mxu0 0.0
    %392 = vmatprep.subr.mxu0 0.0
    %393 = vmatpush1.msra.mxu0 0.0
    %394 = vmatprep.subr.mxu0 0.0
    %395 = vmatpush1.msra.mxu0 0.0
    %396 = vmatprep.subr.mxu0 0.0
    %397 = vmatpush1.msra.mxu0 0.0
    %398 = vmatprep.subr.mxu0 0.0
    %399 = vmatpush1.msra.mxu0 0.0
    %400 = vmatprep.subr.mxu0 0.0
    %401 = vmatpush1.msra.mxu0 0.0
    %402 = vmatprep.subr.mxu0 0.0
    %403 = vmatpush1.msra.mxu0 0.0
    %404 = vmatprep.subr.mxu0 0.0
    %405 = vmatpush1.msra.mxu0 0.0
    %406 = vmatprep.subr.mxu0 0.0
    %407 = vmatpush1.msra.mxu0 0.0
    %408 = vmatprep.subr.mxu0 0.0
    %409 = vmatpush1.msra.mxu0 0.0
    %410 = vmatprep.subr.mxu0 0.0
    %411 = vmatpush1.msra.mxu0 0.0
    %412 = vmatprep.subr.mxu0 0.0
    %413 = vmatpush1.msra.mxu0 0.0
    %414 = vmatprep.subr.mxu0 0.0
    %415 = vmatpush1.msra.mxu0 0.0
    %416 = vmatprep.mubr.f32.mxu0 0.0
    %417 = vmatmul.mubr.f32.gmra.mrb[0].mxu0 %v274
    %v418 = vpop.f32.mrb[0].mxu0
    %v419 = vadd.f32 0.0, %v418
    %v420 = vpop.f32.mrb[0].mxu0
    %v421 = vadd.f32 0.0, %v420
    %422 = vdwg.mxu0
    %v423 = vadd.f32 %v277, %v348
    %v424 = vadd.f32 %v278, %v350
    %v425 = vadd.f32 %v279, %v419
    %v426 = vadd.f32 %v280, %v421
    %v427 = vxor.u32 %v423, 2147483648
    %v428 = vmul.f32 %v427, 1.442695
    %v429 = vpow.pop %v428
    %v430 = vadd.f32 %v429, 1.0
    %v431 = vrcp.pop %v430
    %v432 = vmul.f32 1.0, %v431
    %v433 = vxor.u32 %v424, 2147483648
    %v434 = vmul.f32 %v433, 1.442695
    %v435 = vpow.pop %v434
    %v436 = vadd.f32 %v435, 1.0
    %v437 = vrcp.pop %v436
    %v438 = vmul.f32 1.0, %v437
    %v439 = vtanh.pop %v425
    %v440 = vxor.u32 %v426, 2147483648
    %v441 = vmul.f32 %v440, 1.442695
    %v442 = vpow.pop %v441
    %v443 = vadd.f32 %v442, 1.0
    %v444 = vrcp.pop %v443
    %v445 = vmul.f32 1.0, %v444
    %v446 = vmul.f32 %v438, %v272
    %v447 = vmul.f32 %v432, %v439
    %v448 = vadd.f32 %v446, %v447
    %v449 = vtanh.pop %v448
    %v450 = vmul.f32 %v445, %v449
    %s451 = scalar_lea.vmem [#allocation2], 8
    %452 = vst [vmem:[%s451] sm:$0xff] %v450
    %s453 = scalar_lea.vmem %s0, 64
    %v454 = vld [vmem:[%s453] sm:$0xff]
    %v455 = vld [vmem:[%s453 + $0x8] sm:$0xff]
    %v456 = vld [vmem:[%s453 + $0x10] sm:$0xff]
    %v457 = vld [vmem:[%s453 + $0x18] sm:$0xff]
    %458 = vmatprep.subr.mxu0 %v38
    %459 = vmatpush1.msra.mxu0 %v37
    %460 = vmatprep.subr.mxu0 %v42
    %461 = vmatpush1.msra.mxu0 %v41
    %462 = vmatprep.subr.mxu0 %v46
    %463 = vmatpush1.msra.mxu0 %v45
    %464 = vmatprep.subr.mxu0 %v50
    %465 = vmatpush1.msra.mxu0 %v49
    %466 = vmatprep.subr.mxu0 %v54
    %467 = vmatpush1.msra.mxu0 %v53
    %468 = vmatprep.subr.mxu0 %v58
    %469 = vmatpush1.msra.mxu0 %v57
    %470 = vmatprep.subr.mxu0 %v62
    %471 = vmatpush1.msra.mxu0 %v61
    %472 = vmatprep.subr.mxu0 %v66
    %473 = vmatpush1.msra.mxu0 %v65
    %474 = vmatprep.subr.mxu0 %v70
    %475 = vmatpush1.msra.mxu0 %v69
    %476 = vmatprep.subr.mxu0 %v74
    %477 = vmatpush1.msra.mxu0 %v73
    %478 = vmatprep.subr.mxu0 %v78
    %479 = vmatpush1.msra.mxu0 %v77
    %480 = vmatprep.subr.mxu0 %v82
    %481 = vmatpush1.msra.mxu0 %v81
    %482 = vmatprep.subr.mxu0 %v86
    %483 = vmatpush1.msra.mxu0 %v85
    %484 = vmatprep.subr.mxu0 %v90
    %485 = vmatpush1.msra.mxu0 %v89
    %486 = vmatprep.subr.mxu0 %v94
    %487 = vmatpush1.msra.mxu0 %v93
    %488 = vmatprep.subr.mxu0 %v98
    %489 = vmatpush1.msra.mxu0 %v97
    %490 = vmatprep.subr.mxu0 0.0
    %491 = vmatpush1.msra.mxu0 0.0
    %492 = vmatprep.subr.mxu0 0.0
    %493 = vmatpush1.msra.mxu0 0.0
    %494 = vmatprep.subr.mxu0 0.0
    %495 = vmatpush1.msra.mxu0 0.0
    %496 = vmatprep.subr.mxu0 0.0
    %497 = vmatpush1.msra.mxu0 0.0
    %498 = vmatprep.subr.mxu0 0.0
    %499 = vmatpush1.msra.mxu0 0.0
    %500 = vmatprep.subr.mxu0 0.0
    %501 = vmatpush1.msra.mxu0 0.0
    %502 = vmatprep.subr.mxu0 0.0
    %503 = vmatpush1.msra.mxu0 0.0
    %504 = vmatprep.subr.mxu0 0.0
    %505 = vmatpush1.msra.mxu0 0.0
    %506 = vmatprep.subr.mxu0 0.0
    %507 = vmatpush1.msra.mxu0 0.0
    %508 = vmatprep.subr.mxu0 0.0
    %509 = vmatpush1.msra.mxu0 0.0
    %510 = vmatprep.subr.mxu0 0.0
    %511 = vmatpush1.msra.mxu0 0.0
    %512 = vmatprep.subr.mxu0 0.0
    %513 = vmatpush1.msra.mxu0 0.0
    %514 = vmatprep.subr.mxu0 0.0
    %515 = vmatpush1.msra.mxu0 0.0
    %516 = vmatprep.subr.mxu0 0.0
    %517 = vmatpush1.msra.mxu0 0.0
    %518 = vmatprep.subr.mxu0 0.0
    %519 = vmatpush1.msra.mxu0 0.0
    %520 = vmatprep.subr.mxu0 0.0
    %521 = vmatpush1.msra.mxu0 0.0
    %522 = vmatprep.mubr.f32.mxu0 0.0
    %523 = vmatmul.mubr.f32.gmra.mrb[0].mxu0 %v450
    %v524 = vpop.f32.mrb[0].mxu0
    %v525 = vadd.f32 0.0, %v524
    %v526 = vpop.f32.mrb[0].mxu0
    %v527 = vadd.f32 0.0, %v526
    %528 = vdwg.mxu0
    %529 = vmatprep.subr.mxu0 %v40
    %530 = vmatpush1.msra.mxu0 %v39
    %531 = vmatprep.subr.mxu0 %v44
    %532 = vmatpush1.msra.mxu0 %v43
    %533 = vmatprep.subr.mxu0 %v48
    %534 = vmatpush1.msra.mxu0 %v47
    %535 = vmatprep.subr.mxu0 %v52
    %536 = vmatpush1.msra.mxu0 %v51
    %537 = vmatprep.subr.mxu0 %v56
    %538 = vmatpush1.msra.mxu0 %v55
    %539 = vmatprep.subr.mxu0 %v60
    %540 = vmatpush1.msra.mxu0 %v59
    %541 = vmatprep.subr.mxu0 %v64
    %542 = vmatpush1.msra.mxu0 %v63
    %543 = vmatprep.subr.mxu0 %v68
    %544 = vmatpush1.msra.mxu0 %v67
    %545 = vmatprep.subr.mxu0 %v72
    %546 = vmatpush1.msra.mxu0 %v71
    %547 = vmatprep.subr.mxu0 %v76
    %548 = vmatpush1.msra.mxu0 %v75
    %549 = vmatprep.subr.mxu0 %v80
    %550 = vmatpush1.msra.mxu0 %v79
    %551 = vmatprep.subr.mxu0 %v84
    %552 = vmatpush1.msra.mxu0 %v83
    %553 = vmatprep.subr.mxu0 %v88
    %554 = vmatpush1.msra.mxu0 %v87
    %555 = vmatprep.subr.mxu0 %v92
    %556 = vmatpush1.msra.mxu0 %v91
    %557 = vmatprep.subr.mxu0 %v96
    %558 = vmatpush1.msra.mxu0 %v95
    %559 = vmatprep.subr.mxu0 %v100
    %560 = vmatpush1.msra.mxu0 %v99
    %561 = vmatprep.subr.mxu0 0.0
    %562 = vmatpush1.msra.mxu0 0.0
    %563 = vmatprep.subr.mxu0 0.0
    %564 = vmatpush1.msra.mxu0 0.0
    %565 = vmatprep.subr.mxu0 0.0
    %566 = vmatpush1.msra.mxu0 0.0
    %567 = vmatprep.subr.mxu0 0.0
    %568 = vmatpush1.msra.mxu0 0.0
    %569 = vmatprep.subr.mxu0 0.0
    %570 = vmatpush1.msra.mxu0 0.0
    %571 = vmatprep.subr.mxu0 0.0
    %572 = vmatpush1.msra.mxu0 0.0
    %573 = vmatprep.subr.mxu0 0.0
    %574 = vmatpush1.msra.mxu0 0.0
    %575 = vmatprep.subr.mxu0 0.0
    %576 = vmatpush1.msra.mxu0 0.0
    %577 = vmatprep.subr.mxu0 0.0
    %578 = vmatpush1.msra.mxu0 0.0
    %579 = vmatprep.subr.mxu0 0.0
    %580 = vmatpush1.msra.mxu0 0.0
    %581 = vmatprep.subr.mxu0 0.0
    %582 = vmatpush1.msra.mxu0 0.0
    %583 = vmatprep.subr.mxu0 0.0
    %584 = vmatpush1.msra.mxu0 0.0
    %585 = vmatprep.subr.mxu0 0.0
    %586 = vmatpush1.msra.mxu0 0.0
    %587 = vmatprep.subr.mxu0 0.0
    %588 = vmatpush1.msra.mxu0 0.0
    %589 = vmatprep.subr.mxu0 0.0
    %590 = vmatpush1.msra.mxu0 0.0
    %591 = vmatprep.subr.mxu0 0.0
    %592 = vmatpush1.msra.mxu0 0.0
    %593 = vmatprep.mubr.f32.mxu0 0.0
    %594 = vmatmul.mubr.f32.gmra.mrb[0].mxu0 %v450
    %v595 = vpop.f32.mrb[0].mxu0
    %v596 = vadd.f32 0.0, %v595
    %v597 = vpop.f32.mrb[0].mxu0
    %v598 = vadd.f32 0.0, %v597
    %599 = vdwg.mxu0
    %v600 = vadd.f32 %v454, %v525
    %v601 = vadd.f32 %v455, %v527
    %v602 = vadd.f32 %v456, %v596
    %v603 = vadd.f32 %v457, %v598
    %v604 = vxor.u32 %v600, 2147483648
    %v605 = vmul.f32 %v604, 1.442695
    %v606 = vpow.pop %v605
    %v607 = vadd.f32 %v606, 1.0
    %v608 = vrcp.pop %v607
    %v609 = vmul.f32 1.0, %v608
    %v610 = vxor.u32 %v601, 2147483648
    %v611 = vmul.f32 %v610, 1.442695
    %v612 = vpow.pop %v611
    %v613 = vadd.f32 %v612, 1.0
    %v614 = vrcp.pop %v613
    %v615 = vmul.f32 1.0, %v614
    %v616 = vtanh.pop %v602
    %v617 = vxor.u32 %v603, 2147483648
    %v618 = vmul.f32 %v617, 1.442695
    %v619 = vpow.pop %v618
    %v620 = vadd.f32 %v619, 1.0
    %v621 = vrcp.pop %v620
    %v622 = vmul.f32 1.0, %v621
    %v623 = vmul.f32 %v615, %v448
    %v624 = vmul.f32 %v609, %v616
    %v625 = vadd.f32 %v623, %v624
    %v626 = vtanh.pop %v625
    %v627 = vmul.f32 %v622, %v626
    %s628 = scalar_lea.vmem [#allocation2], 16
    %629 = vst [vmem:[%s628] sm:$0xff] %v627
    %s630 = scalar_lea.vmem %s0, 96
    %v631 = vld [vmem:[%s630] sm:$0xff]
    %v632 = vld [vmem:[%s630 + $0x8] sm:$0xff]
    %v633 = vld [vmem:[%s630 + $0x10] sm:$0xff]
    %v634 = vld [vmem:[%s630 + $0x18] sm:$0xff]
    %635 = vmatprep.subr.mxu0 %v38
    %636 = vmatpush1.msra.mxu0 %v37
    %637 = vmatprep.subr.mxu0 %v42
    %638 = vmatpush1.msra.mxu0 %v41
    %639 = vmatprep.subr.mxu0 %v46
    %640 = vmatpush1.msra.mxu0 %v45
    %641 = vmatprep.subr.mxu0 %v50
    %642 = vmatpush1.msra.mxu0 %v49
    %643 = vmatprep.subr.mxu0 %v54
    %644 = vmatpush1.msra.mxu0 %v53
    %645 = vmatprep.subr.mxu0 %v58
    %646 = vmatpush1.msra.mxu0 %v57
    %647 = vmatprep.subr.mxu0 %v62
    %648 = vmatpush1.msra.mxu0 %v61
    %649 = vmatprep.subr.mxu0 %v66
    %650 = vmatpush1.msra.mxu0 %v65
    %651 = vmatprep.subr.mxu0 %v70
    %652 = vmatpush1.msra.mxu0 %v69
    %653 = vmatprep.subr.mxu0 %v74
    %654 = vmatpush1.msra.mxu0 %v73
    %655 = vmatprep.subr.mxu0 %v78
    %656 = vmatpush1.msra.mxu0 %v77
    %657 = vmatprep.subr.mxu0 %v82
    %658 = vmatpush1.msra.mxu0 %v81
    %659 = vmatprep.subr.mxu0 %v86
    %660 = vmatpush1.msra.mxu0 %v85
    %661 = vmatprep.subr.mxu0 %v90
    %662 = vmatpush1.msra.mxu0 %v89
    %663 = vmatprep.subr.mxu0 %v94
    %664 = vmatpush1.msra.mxu0 %v93
    %665 = vmatprep.subr.mxu0 %v98
    %666 = vmatpush1.msra.mxu0 %v97
    %667 = vmatprep.subr.mxu0 0.0
    %668 = vmatpush1.msra.mxu0 0.0
    %669 = vmatprep.subr.mxu0 0.0
    %670 = vmatpush1.msra.mxu0 0.0
    %671 = vmatprep.subr.mxu0 0.0
    %672 = vmatpush1.msra.mxu0 0.0
    %673 = vmatprep.subr.mxu0 0.0
    %674 = vmatpush1.msra.mxu0 0.0
    %675 = vmatprep.subr.mxu0 0.0
    %676 = vmatpush1.msra.mxu0 0.0
    %677 = vmatprep.subr.mxu0 0.0
    %678 = vmatpush1.msra.mxu0 0.0
    %679 = vmatprep.subr.mxu0 0.0
    %680 = vmatpush1.msra.mxu0 0.0
    %681 = vmatprep.subr.mxu0 0.0
    %682 = vmatpush1.msra.mxu0 0.0
    %683 = vmatprep.subr.mxu0 0.0
    %684 = vmatpush1.msra.mxu0 0.0
    %685 = vmatprep.subr.mxu0 0.0
    %686 = vmatpush1.msra.mxu0 0.0
    %687 = vmatprep.subr.mxu0 0.0
    %688 = vmatpush1.msra.mxu0 0.0
    %689 = vmatprep.subr.mxu0 0.0
    %690 = vmatpush1.msra.mxu0 0.0
    %691 = vmatprep.subr.mxu0 0.0
    %692 = vmatpush1.msra.mxu0 0.0
    %693 = vmatprep.subr.mxu0 0.0
    %694 = vmatpush1.msra.mxu0 0.0
    %695 = vmatprep.subr.mxu0 0.0
    %696 = vmatpush1.msra.mxu0 0.0
    %697 = vmatprep.subr.mxu0 0.0
    %698 = vmatpush1.msra.mxu0 0.0
    %699 = vmatprep.mubr.f32.mxu0 0.0
    %700 = vmatmul.mubr.f32.gmra.mrb[0].mxu0 %v627
    %v701 = vpop.f32.mrb[0].mxu0
    %v702 = vadd.f32 0.0, %v701
    %v703 = vpop.f32.mrb[0].mxu0
    %v704 = vadd.f32 0.0, %v703
    %705 = vdwg.mxu0
    %706 = vmatprep.subr.mxu0 %v40
    %707 = vmatpush1.msra.mxu0 %v39
    %708 = vmatprep.subr.mxu0 %v44
    %709 = vmatpush1.msra.mxu0 %v43
    %710 = vmatprep.subr.mxu0 %v48
    %711 = vmatpush1.msra.mxu0 %v47
    %712 = vmatprep.subr.mxu0 %v52
    %713 = vmatpush1.msra.mxu0 %v51
    %714 = vmatprep.subr.mxu0 %v56
    %715 = vmatpush1.msra.mxu0 %v55
    %716 = vmatprep.subr.mxu0 %v60
    %717 = vmatpush1.msra.mxu0 %v59
    %718 = vmatprep.subr.mxu0 %v64
    %719 = vmatpush1.msra.mxu0 %v63
    %720 = vmatprep.subr.mxu0 %v68
    %721 = vmatpush1.msra.mxu0 %v67
    %722 = vmatprep.subr.mxu0 %v72
    %723 = vmatpush1.msra.mxu0 %v71
    %724 = vmatprep.subr.mxu0 %v76
    %725 = vmatpush1.msra.mxu0 %v75
    %726 = vmatprep.subr.mxu0 %v80
    %727 = vmatpush1.msra.mxu0 %v79
    %728 = vmatprep.subr.mxu0 %v84
    %729 = vmatpush1.msra.mxu0 %v83
    %730 = vmatprep.subr.mxu0 %v88
    %731 = vmatpush1.msra.mxu0 %v87
    %732 = vmatprep.subr.mxu0 %v92
    %733 = vmatpush1.msra.mxu0 %v91
    %734 = vmatprep.subr.mxu0 %v96
    %735 = vmatpush1.msra.mxu0 %v95
    %736 = vmatprep.subr.mxu0 %v100
    %737 = vmatpush1.msra.mxu0 %v99
    %738 = vmatprep.subr.mxu0 0.0
    %739 = vmatpush1.msra.mxu0 0.0
    %740 = vmatprep.subr.mxu0 0.0
    %741 = vmatpush1.msra.mxu0 0.0
    %742 = vmatprep.subr.mxu0 0.0
    %743 = vmatpush1.msra.mxu0 0.0
    %744 = vmatprep.subr.mxu0 0.0
    %745 = vmatpush1.msra.mxu0 0.0
    %746 = vmatprep.subr.mxu0 0.0
    %747 = vmatpush1.msra.mxu0 0.0
    %748 = vmatprep.subr.mxu0 0.0
    %749 = vmatpush1.msra.mxu0 0.0
    %750 = vmatprep.subr.mxu0 0.0
    %751 = vmatpush1.msra.mxu0 0.0
    %752 = vmatprep.subr.mxu0 0.0
    %753 = vmatpush1.msra.mxu0 0.0
    %754 = vmatprep.subr.mxu0 0.0
    %755 = vmatpush1.msra.mxu0 0.0
    %756 = vmatprep.subr.mxu0 0.0
    %757 = vmatpush1.msra.mxu0 0.0
    %758 = vmatprep.subr.mxu0 0.0
    %759 = vmatpush1.msra.mxu0 0.0
    %760 = vmatprep.subr.mxu0 0.0
    %761 = vmatpush1.msra.mxu0 0.0
    %762 = vmatprep.subr.mxu0 0.0
    %763 = vmatpush1.msra.mxu0 0.0
    %764 = vmatprep.subr.mxu0 0.0
    %765 = vmatpush1.msra.mxu0 0.0
    %766 = vmatprep.subr.mxu0 0.0
    %767 = vmatpush1.msra.mxu0 0.0
    %768 = vmatprep.subr.mxu0 0.0
    %769 = vmatpush1.msra.mxu0 0.0
    %770 = vmatprep.mubr.f32.mxu0 0.0
    %771 = vmatmul.mubr.f32.gmra.mrb[0].mxu0 %v627
    %v772 = vpop.f32.mrb[0].mxu0
    %v773 = vadd.f32 0.0, %v772
    %v774 = vpop.f32.mrb[0].mxu0
    %v775 = vadd.f32 0.0, %v774
    %776 = vdwg.mxu0
    %v777 = vadd.f32 %v631, %v702
    %v778 = vadd.f32 %v632, %v704
    %v779 = vadd.f32 %v633, %v773
    %v780 = vadd.f32 %v634, %v775
    %v781 = vxor.u32 %v777, 2147483648
    %v782 = vmul.f32 %v781, 1.442695
    %v783 = vpow.pop %v782
    %v784 = vadd.f32 %v783, 1.0
    %v785 = vrcp.pop %v784
    %v786 = vmul.f32 1.0, %v785
    %v787 = vxor.u32 %v778, 2147483648
    %v788 = vmul.f32 %v787, 1.442695
    %v789 = vpow.pop %v788
    %v790 = vadd.f32 %v789, 1.0
    %v791 = vrcp.pop %v790
    %v792 = vmul.f32 1.0, %v791
    %v793 = vtanh.pop %v779
    %v794 = vxor.u32 %v780, 2147483648
    %v795 = vmul.f32 %v794, 1.442695
    %v796 = vpow.pop %v795
    %v797 = vadd.f32 %v796, 1.0
    %v798 = vrcp.pop %v797
    %v799 = vmul.f32 1.0, %v798
    %v800 = vmul.f32 %v792, %v625
    %v801 = vmul.f32 %v786, %v793
    %v802 = vadd.f32 %v800, %v801
    %v803 = vtanh.pop %v802
    %v804 = vmul.f32 %v799, %v803
    %s805 = scalar_lea.vmem [#allocation2], 24
    %806 = vst [vmem:[%s805] sm:$0xff] %v804
    %s807 = scalar_lea.vmem %s0, 128
    %v808 = vld [vmem:[%s807] sm:$0xff]
    %v809 = vld [vmem:[%s807 + $0x8] sm:$0xff]
    %v810 = vld [vmem:[%s807 + $0x10] sm:$0xff]
    %v811 = vld [vmem:[%s807 + $0x18] sm:$0xff]
    %812 = vmatprep.subr.mxu0 %v38
    %813 = vmatpush1.msra.mxu0 %v37
    %814 = vmatprep.subr.mxu0 %v42
    %815 = vmatpush1.msra.mxu0 %v41
    %816 = vmatprep.subr.mxu0 %v46
    %817 = vmatpush1.msra.mxu0 %v45
    %818 = vmatprep.subr.mxu0 %v50
    %819 = vmatpush1.msra.mxu0 %v49
    %820 = vmatprep.subr.mxu0 %v54
    %821 = vmatpush1.msra.mxu0 %v53
    %822 = vmatprep.subr.mxu0 %v58
    %823 = vmatpush1.msra.mxu0 %v57
    %824 = vmatprep.subr.mxu0 %v62
    %825 = vmatpush1.msra.mxu0 %v61
    %826 = vmatprep.subr.mxu0 %v66
    %827 = vmatpush1.msra.mxu0 %v65
    %828 = vmatprep.subr.mxu0 %v70
    %829 = vmatpush1.msra.mxu0 %v69
    %830 = vmatprep.subr.mxu0 %v74
    %831 = vmatpush1.msra.mxu0 %v73
    %832 = vmatprep.subr.mxu0 %v78
    %833 = vmatpush1.msra.mxu0 %v77
    %834 = vmatprep.subr.mxu0 %v82
    %835 = vmatpush1.msra.mxu0 %v81
    %836 = vmatprep.subr.mxu0 %v86
    %837 = vmatpush1.msra.mxu0 %v85
    %838 = vmatprep.subr.mxu0 %v90
    %839 = vmatpush1.msra.mxu0 %v89
    %840 = vmatprep.subr.mxu0 %v94
    %841 = vmatpush1.msra.mxu0 %v93
    %842 = vmatprep.subr.mxu0 %v98
    %843 = vmatpush1.msra.mxu0 %v97
    %844 = vmatprep.subr.mxu0 0.0
    %845 = vmatpush1.msra.mxu0 0.0
    %846 = vmatprep.subr.mxu0 0.0
    %847 = vmatpush1.msra.mxu0 0.0
    %848 = vmatprep.subr.mxu0 0.0
    %849 = vmatpush1.msra.mxu0 0.0
    %850 = vmatprep.subr.mxu0 0.0
    %851 = vmatpush1.msra.mxu0 0.0
    %852 = vmatprep.subr.mxu0 0.0
    %853 = vmatpush1.msra.mxu0 0.0
    %854 = vmatprep.subr.mxu0 0.0
    %855 = vmatpush1.msra.mxu0 0.0
    %856 = vmatprep.subr.mxu0 0.0
    %857 = vmatpush1.msra.mxu0 0.0
    %858 = vmatprep.subr.mxu0 0.0
    %859 = vmatpush1.msra.mxu0 0.0
    %860 = vmatprep.subr.mxu0 0.0
    %861 = vmatpush1.msra.mxu0 0.0
    %862 = vmatprep.subr.mxu0 0.0
    %863 = vmatpush1.msra.mxu0 0.0
    %864 = vmatprep.subr.mxu0 0.0
    %865 = vmatpush1.msra.mxu0 0.0
    %866 = vmatprep.subr.mxu0 0.0
    %867 = vmatpush1.msra.mxu0 0.0
    %868 = vmatprep.subr.mxu0 0.0
    %869 = vmatpush1.msra.mxu0 0.0
    %870 = vmatprep.subr.mxu0 0.0
    %871 = vmatpush1.msra.mxu0 0.0
    %872 = vmatprep.subr.mxu0 0.0
    %873 = vmatpush1.msra.mxu0 0.0
    %874 = vmatprep.subr.mxu0 0.0
    %875 = vmatpush1.msra.mxu0 0.0
    %876 = vmatprep.mubr.f32.mxu0 0.0
    %877 = vmatmul.mubr.f32.gmra.mrb[0].mxu0 %v804
    %v878 = vpop.f32.mrb[0].mxu0
    %v879 = vadd.f32 0.0, %v878
    %v880 = vpop.f32.mrb[0].mxu0
    %v881 = vadd.f32 0.0, %v880
    %882 = vdwg.mxu0
    %883 = vmatprep.subr.mxu0 %v40
    %884 = vmatpush1.msra.mxu0 %v39
    %885 = vmatprep.subr.mxu0 %v44
    %886 = vmatpush1.msra.mxu0 %v43
    %887 = vmatprep.subr.mxu0 %v48
    %888 = vmatpush1.msra.mxu0 %v47
    %889 = vmatprep.subr.mxu0 %v52
    %890 = vmatpush1.msra.mxu0 %v51
    %891 = vmatprep.subr.mxu0 %v56
    %892 = vmatpush1.msra.mxu0 %v55
    %893 = vmatprep.subr.mxu0 %v60
    %894 = vmatpush1.msra.mxu0 %v59
    %895 = vmatprep.subr.mxu0 %v64
    %896 = vmatpush1.msra.mxu0 %v63
    %897 = vmatprep.subr.mxu0 %v68
    %898 = vmatpush1.msra.mxu0 %v67
    %899 = vmatprep.subr.mxu0 %v72
    %900 = vmatpush1.msra.mxu0 %v71
    %901 = vmatprep.subr.mxu0 %v76
    %902 = vmatpush1.msra.mxu0 %v75
    %903 = vmatprep.subr.mxu0 %v80
    %904 = vmatpush1.msra.mxu0 %v79
    %905 = vmatprep.subr.mxu0 %v84
    %906 = vmatpush1.msra.mxu0 %v83
    %907 = vmatprep.subr.mxu0 %v88
    %908 = vmatpush1.msra.mxu0 %v87
    %909 = vmatprep.subr.mxu0 %v92
    %910 = vmatpush1.msra.mxu0 %v91
    %911 = vmatprep.subr.mxu0 %v96
    %912 = vmatpush1.msra.mxu0 %v95
    %913 = vmatprep.subr.mxu0 %v100
    %914 = vmatpush1.msra.mxu0 %v99
    %915 = vmatprep.subr.mxu0 0.0
    %916 = vmatpush1.msra.mxu0 0.0
    %917 = vmatprep.subr.mxu0 0.0
    %918 = vmatpush1.msra.mxu0 0.0
    %919 = vmatprep.subr.mxu0 0.0
    %920 = vmatpush1.msra.mxu0 0.0
    %921 = vmatprep.subr.mxu0 0.0
    %922 = vmatpush1.msra.mxu0 0.0
    %923 = vmatprep.subr.mxu0 0.0
    %924 = vmatpush1.msra.mxu0 0.0
    %925 = vmatprep.subr.mxu0 0.0
    %926 = vmatpush1.msra.mxu0 0.0
    %927 = vmatprep.subr.mxu0 0.0
    %928 = vmatpush1.msra.mxu0 0.0
    %929 = vmatprep.subr.mxu0 0.0
    %930 = vmatpush1.msra.mxu0 0.0
    %931 = vmatprep.subr.mxu0 0.0
    %932 = vmatpush1.msra.mxu0 0.0
    %933 = vmatprep.subr.mxu0 0.0
    %934 = vmatpush1.msra.mxu0 0.0
    %935 = vmatprep.subr.mxu0 0.0
    %936 = vmatpush1.msra.mxu0 0.0
    %937 = vmatprep.subr.mxu0 0.0
    %938 = vmatpush1.msra.mxu0 0.0
    %939 = vmatprep.subr.mxu0 0.0
    %940 = vmatpush1.msra.mxu0 0.0
    %941 = vmatprep.subr.mxu0 0.0
    %942 = vmatpush1.msra.mxu0 0.0
    %943 = vmatprep.subr.mxu0 0.0
    %944 = vmatpush1.msra.mxu0 0.0
    %945 = vmatprep.subr.mxu0 0.0
    %946 = vmatpush1.msra.mxu0 0.0
    %947 = vmatprep.mubr.f32.mxu0 0.0
    %948 = vmatmul.mubr.f32.gmra.mrb[0].mxu0 %v804
    %v949 = vpop.f32.mrb[0].mxu0
    %v950 = vadd.f32 0.0, %v949
    %v951 = vpop.f32.mrb[0].mxu0
    %v952 = vadd.f32 0.0, %v951
    %953 = vdwg.mxu0
    %v954 = vadd.f32 %v808, %v879
    %v955 = vadd.f32 %v809, %v881
    %v956 = vadd.f32 %v810, %v950
    %v957 = vadd.f32 %v811, %v952
    %v958 = vxor.u32 %v954, 2147483648
    %v959 = vmul.f32 %v958, 1.442695
    %v960 = vpow.pop %v959
    %v961 = vadd.f32 %v960, 1.0
    %v962 = vrcp.pop %v961
    %v963 = vmul.f32 1.0, %v962
    %v964 = vxor.u32 %v955, 2147483648
    %v965 = vmul.f32 %v964, 1.442695
    %v966 = vpow.pop %v965
    %v967 = vadd.f32 %v966, 1.0
    %v968 = vrcp.pop %v967
    %v969 = vmul.f32 1.0, %v968
    %v970 = vtanh.pop %v956
    %v971 = vxor.u32 %v957, 2147483648
    %v972 = vmul.f32 %v971, 1.442695
    %v973 = vpow.pop %v972
    %v974 = vadd.f32 %v973, 1.0
    %v975 = vrcp.pop %v974
    %v976 = vmul.f32 1.0, %v975
    %v977 = vmul.f32 %v969, %v802
    %v978 = vmul.f32 %v963, %v970
    %v979 = vadd.f32 %v977, %v978
    %v980 = vtanh.pop %v979
    %v981 = vmul.f32 %v976, %v980
    %s982 = scalar_lea.vmem [#allocation2], 32
    %983 = vst [vmem:[%s982] sm:$0xff] %v981
    %s984 = scalar_lea.vmem %s0, 160
    %v985 = vld [vmem:[%s984] sm:$0xff]
    %v986 = vld [vmem:[%s984 + $0x8] sm:$0xff]
    %v987 = vld [vmem:[%s984 + $0x10] sm:$0xff]
    %v988 = vld [vmem:[%s984 + $0x18] sm:$0xff]
    %989 = vmatprep.subr.mxu0 %v38
    %990 = vmatpush1.msra.mxu0 %v37
    %991 = vmatprep.subr.mxu0 %v42
    %992 = vmatpush1.msra.mxu0 %v41
    %993 = vmatprep.subr.mxu0 %v46
    %994 = vmatpush1.msra.mxu0 %v45
    %995 = vmatprep.subr.mxu0 %v50
    %996 = vmatpush1.msra.mxu0 %v49
    %997 = vmatprep.subr.mxu0 %v54
    %998 = vmatpush1.msra.mxu0 %v53
    %999 = vmatprep.subr.mxu0 %v58
    %1000 = vmatpush1.msra.mxu0 %v57
    %1001 = vmatprep.subr.mxu0 %v62
    %1002 = vmatpush1.msra.mxu0 %v61
    %1003 = vmatprep.subr.mxu0 %v66
    %1004 = vmatpush1.msra.mxu0 %v65
    %1005 = vmatprep.subr.mxu0 %v70
    %1006 = vmatpush1.msra.mxu0 %v69
    %1007 = vmatprep.subr.mxu0 %v74
    %1008 = vmatpush1.msra.mxu0 %v73
    %1009 = vmatprep.subr.mxu0 %v78
    %1010 = vmatpush1.msra.mxu0 %v77
    %1011 = vmatprep.subr.mxu0 %v82
    %1012 = vmatpush1.msra.mxu0 %v81
    %1013 = vmatprep.subr.mxu0 %v86
    %1014 = vmatpush1.msra.mxu0 %v85
    %1015 = vmatprep.subr.mxu0 %v90
    %1016 = vmatpush1.msra.mxu0 %v89
    %1017 = vmatprep.subr.mxu0 %v94
    %1018 = vmatpush1.msra.mxu0 %v93
    %1019 = vmatprep.subr.mxu0 %v98
    %1020 = vmatpush1.msra.mxu0 %v97
    %1021 = vmatprep.subr.mxu0 0.0
    %1022 = vmatpush1.msra.mxu0 0.0
    %1023 = vmatprep.subr.mxu0 0.0
    %1024 = vmatpush1.msra.mxu0 0.0
    %1025 = vmatprep.subr.mxu0 0.0
    %1026 = vmatpush1.msra.mxu0 0.0
    %1027 = vmatprep.subr.mxu0 0.0
    %1028 = vmatpush1.msra.mxu0 0.0
    %1029 = vmatprep.subr.mxu0 0.0
    %1030 = vmatpush1.msra.mxu0 0.0
    %1031 = vmatprep.subr.mxu0 0.0
    %1032 = vmatpush1.msra.mxu0 0.0
    %1033 = vmatprep.subr.mxu0 0.0
    %1034 = vmatpush1.msra.mxu0 0.0
    %1035 = vmatprep.subr.mxu0 0.0
    %1036 = vmatpush1.msra.mxu0 0.0
    %1037 = vmatprep.subr.mxu0 0.0
    %1038 = vmatpush1.msra.mxu0 0.0
    %1039 = vmatprep.subr.mxu0 0.0
    %1040 = vmatpush1.msra.mxu0 0.0
    %1041 = vmatprep.subr.mxu0 0.0
    %1042 = vmatpush1.msra.mxu0 0.0
    %1043 = vmatprep.subr.mxu0 0.0
    %1044 = vmatpush1.msra.mxu0 0.0
    %1045 = vmatprep.subr.mxu0 0.0
    %1046 = vmatpush1.msra.mxu0 0.0
    %1047 = vmatprep.subr.mxu0 0.0
    %1048 = vmatpush1.msra.mxu0 0.0
    %1049 = vmatprep.subr.mxu0 0.0
    %1050 = vmatpush1.msra.mxu0 0.0
    %1051 = vmatprep.subr.mxu0 0.0
    %1052 = vmatpush1.msra.mxu0 0.0
    %1053 = vmatprep.mubr.f32.mxu0 0.0
    %1054 = vmatmul.mubr.f32.gmra.mrb[0].mxu0 %v981
    %v1055 = vpop.f32.mrb[0].mxu0
    %v1056 = vadd.f32 0.0, %v1055
    %v1057 = vpop.f32.mrb[0].mxu0
    %v1058 = vadd.f32 0.0, %v1057
    %1059 = vdwg.mxu0
    %1060 = vmatprep.subr.mxu0 %v40
    %1061 = vmatpush1.msra.mxu0 %v39
    %1062 = vmatprep.subr.mxu0 %v44
    %1063 = vmatpush1.msra.mxu0 %v43
    %1064 = vmatprep.subr.mxu0 %v48
    %1065 = vmatpush1.msra.mxu0 %v47
    %1066 = vmatprep.subr.mxu0 %v52
    %1067 = vmatpush1.msra.mxu0 %v51
    %1068 = vmatprep.subr.mxu0 %v56
    %1069 = vmatpush1.msra.mxu0 %v55
    %1070 = vmatprep.subr.mxu0 %v60
    %1071 = vmatpush1.msra.mxu0 %v59
    %1072 = vmatprep.subr.mxu0 %v64
    %1073 = vmatpush1.msra.mxu0 %v63
    %1074 = vmatprep.subr.mxu0 %v68
    %1075 = vmatpush1.msra.mxu0 %v67
    %1076 = vmatprep.subr.mxu0 %v72
    %1077 = vmatpush1.msra.mxu0 %v71
    %1078 = vmatprep.subr.mxu0 %v76
    %1079 = vmatpush1.msra.mxu0 %v75
    %1080 = vmatprep.subr.mxu0 %v80
    %1081 = vmatpush1.msra.mxu0 %v79
    %1082 = vmatprep.subr.mxu0 %v84
    %1083 = vmatpush1.msra.mxu0 %v83
    %1084 = vmatprep.subr.mxu0 %v88
    %1085 = vmatpush1.msra.mxu0 %v87
    %1086 = vmatprep.subr.mxu0 %v92
    %1087 = vmatpush1.msra.mxu0 %v91
    %1088 = vmatprep.subr.mxu0 %v96
    %1089 = vmatpush1.msra.mxu0 %v95
    %1090 = vmatprep.subr.mxu0 %v100
    %1091 = vmatpush1.msra.mxu0 %v99
    %1092 = vmatprep.subr.mxu0 0.0
    %1093 = vmatpush1.msra.mxu0 0.0
    %1094 = vmatprep.subr.mxu0 0.0
    %1095 = vmatpush1.msra.mxu0 0.0
    %1096 = vmatprep.subr.mxu0 0.0
    %1097 = vmatpush1.msra.mxu0 0.0
    %1098 = vmatprep.subr.mxu0 0.0
    %1099 = vmatpush1.msra.mxu0 0.0
    %1100 = vmatprep.subr.mxu0 0.0
    %1101 = vmatpush1.msra.mxu0 0.0
    %1102 = vmatprep.subr.mxu0 0.0
    %1103 = vmatpush1.msra.mxu0 0.0
    %1104 = vmatprep.subr.mxu0 0.0
    %1105 = vmatpush1.msra.mxu0 0.0
    %1106 = vmatprep.subr.mxu0 0.0
    %1107 = vmatpush1.msra.mxu0 0.0
    %1108 = vmatprep.subr.mxu0 0.0
    %1109 = vmatpush1.msra.mxu0 0.0
    %1110 = vmatprep.subr.mxu0 0.0
    %1111 = vmatpush1.msra.mxu0 0.0
    %1112 = vmatprep.subr.mxu0 0.0
    %1113 = vmatpush1.msra.mxu0 0.0
    %1114 = vmatprep.subr.mxu0 0.0
    %1115 = vmatpush1.msra.mxu0 0.0
    %1116 = vmatprep.subr.mxu0 0.0
    %1117 = vmatpush1.msra.mxu0 0.0
    %1118 = vmatprep.subr.mxu0 0.0
    %1119 = vmatpush1.msra.mxu0 0.0
    %1120 = vmatprep.subr.mxu0 0.0
    %1121 = vmatpush1.msra.mxu0 0.0
    %1122 = vmatprep.subr.mxu0 0.0
    %1123 = vmatpush1.msra.mxu0 0.0
    %1124 = vmatprep.mubr.f32.mxu0 0.0
    %1125 = vmatmul.mubr.f32.gmra.mrb[0].mxu0 %v981
    %v1126 = vpop.f32.mrb[0].mxu0
    %v1127 = vadd.f32 0.0, %v1126
    %v1128 = vpop.f32.mrb[0].mxu0
    %v1129 = vadd.f32 0.0, %v1128
    %1130 = vdwg.mxu0
    %v1131 = vadd.f32 %v985, %v1056
    %v1132 = vadd.f32 %v986, %v1058
    %v1133 = vadd.f32 %v987, %v1127
    %v1134 = vadd.f32 %v988, %v1129
    %v1135 = vxor.u32 %v1131, 2147483648
    %v1136 = vmul.f32 %v1135, 1.442695
    %v1137 = vpow.pop %v1136
    %v1138 = vadd.f32 %v1137, 1.0
    %v1139 = vrcp.pop %v1138
    %v1140 = vmul.f32 1.0, %v1139
    %v1141 = vxor.u32 %v1132, 2147483648
    %v1142 = vmul.f32 %v1141, 1.442695
    %v1143 = vpow.pop %v1142
    %v1144 = vadd.f32 %v1143, 1.0
    %v1145 = vrcp.pop %v1144
    %v1146 = vmul.f32 1.0, %v1145
    %v1147 = vtanh.pop %v1133
    %v1148 = vxor.u32 %v1134, 2147483648
    %v1149 = vmul.f32 %v1148, 1.442695
    %v1150 = vpow.pop %v1149
    %v1151 = vadd.f32 %v1150, 1.0
    %v1152 = vrcp.pop %v1151
    %v1153 = vmul.f32 1.0, %v1152
    %v1154 = vmul.f32 %v1146, %v979
    %v1155 = vmul.f32 %v1140, %v1147
    %v1156 = vadd.f32 %v1154, %v1155
    %v1157 = vtanh.pop %v1156
    %v1158 = vmul.f32 %v1153, %v1157
    %s1159 = scalar_lea.vmem [#allocation2], 40
    %1160 = vst [vmem:[%s1159] sm:$0xff] %v1158
    %s1161 = scalar_lea.vmem %s0, 192
    %v1162 = vld [vmem:[%s1161] sm:$0xff]
    %v1163 = vld [vmem:[%s1161 + $0x8] sm:$0xff]
    %v1164 = vld [vmem:[%s1161 + $0x10] sm:$0xff]
    %v1165 = vld [vmem:[%s1161 + $0x18] sm:$0xff]
    %1166 = vmatprep.subr.mxu0 %v38
    %1167 = vmatpush1.msra.mxu0 %v37
    %1168 = vmatprep.subr.mxu0 %v42
    %1169 = vmatpush1.msra.mxu0 %v41
    %1170 = vmatprep.subr.mxu0 %v46
    %1171 = vmatpush1.msra.mxu0 %v45
    %1172 = vmatprep.subr.mxu0 %v50
    %1173 = vmatpush1.msra.mxu0 %v49
    %1174 = vmatprep.subr.mxu0 %v54
    %1175 = vmatpush1.msra.mxu0 %v53
    %1176 = vmatprep.subr.mxu0 %v58
    %1177 = vmatpush1.msra.mxu0 %v57
    %1178 = vmatprep.subr.mxu0 %v62
    %1179 = vmatpush1.msra.mxu0 %v61
    %1180 = vmatprep.subr.mxu0 %v66
    %1181 = vmatpush1.msra.mxu0 %v65
    %1182 = vmatprep.subr.mxu0 %v70
    %1183 = vmatpush1.msra.mxu0 %v69
    %1184 = vmatprep.subr.mxu0 %v74
    %1185 = vmatpush1.msra.mxu0 %v73
    %1186 = vmatprep.subr.mxu0 %v78
    %1187 = vmatpush1.msra.mxu0 %v77
    %1188 = vmatprep.subr.mxu0 %v82
    %1189 = vmatpush1.msra.mxu0 %v81
    %1190 = vmatprep.subr.mxu0 %v86
    %1191 = vmatpush1.msra.mxu0 %v85
    %1192 = vmatprep.subr.mxu0 %v90
    %1193 = vmatpush1.msra.mxu0 %v89
    %1194 = vmatprep.subr.mxu0 %v94
    %1195 = vmatpush1.msra.mxu0 %v93
    %1196 = vmatprep.subr.mxu0 %v98
    %1197 = vmatpush1.msra.mxu0 %v97
    %1198 = vmatprep.subr.mxu0 0.0
    %1199 = vmatpush1.msra.mxu0 0.0
    %1200 = vmatprep.subr.mxu0 0.0
    %1201 = vmatpush1.msra.mxu0 0.0
    %1202 = vmatprep.subr.mxu0 0.0
    %1203 = vmatpush1.msra.mxu0 0.0
    %1204 = vmatprep.subr.mxu0 0.0
    %1205 = vmatpush1.msra.mxu0 0.0
    %1206 = vmatprep.subr.mxu0 0.0
    %1207 = vmatpush1.msra.mxu0 0.0
    %1208 = vmatprep.subr.mxu0 0.0
    %1209 = vmatpush1.msra.mxu0 0.0
    %1210 = vmatprep.subr.mxu0 0.0
    %1211 = vmatpush1.msra.mxu0 0.0
    %1212 = vmatprep.subr.mxu0 0.0
    %1213 = vmatpush1.msra.mxu0 0.0
    %1214 = vmatprep.subr.mxu0 0.0
    %1215 = vmatpush1.msra.mxu0 0.0
    %1216 = vmatprep.subr.mxu0 0.0
    %1217 = vmatpush1.msra.mxu0 0.0
    %1218 = vmatprep.subr.mxu0 0.0
    %1219 = vmatpush1.msra.mxu0 0.0
    %1220 = vmatprep.subr.mxu0 0.0
    %1221 = vmatpush1.msra.mxu0 0.0
    %1222 = vmatprep.subr.mxu0 0.0
    %1223 = vmatpush1.msra.mxu0 0.0
    %1224 = vmatprep.subr.mxu0 0.0
    %1225 = vmatpush1.msra.mxu0 0.0
    %1226 = vmatprep.subr.mxu0 0.0
    %1227 = vmatpush1.msra.mxu0 0.0
    %1228 = vmatprep.subr.mxu0 0.0
    %1229 = vmatpush1.msra.mxu0 0.0
    %1230 = vmatprep.mubr.f32.mxu0 0.0
    %1231 = vmatmul.mubr.f32.gmra.mrb[0].mxu0 %v1158
    %v1232 = vpop.f32.mrb[0].mxu0
    %v1233 = vadd.f32 0.0, %v1232
    %v1234 = vpop.f32.mrb[0].mxu0
    %v1235 = vadd.f32 0.0, %v1234
    %1236 = vdwg.mxu0
    %1237 = vmatprep.subr.mxu0 %v40
    %1238 = vmatpush1.msra.mxu0 %v39
    %1239 = vmatprep.subr.mxu0 %v44
    %1240 = vmatpush1.msra.mxu0 %v43
    %1241 = vmatprep.subr.mxu0 %v48
    %1242 = vmatpush1.msra.mxu0 %v47
    %1243 = vmatprep.subr.mxu0 %v52
    %1244 = vmatpush1.msra.mxu0 %v51
    %1245 = vmatprep.subr.mxu0 %v56
    %1246 = vmatpush1.msra.mxu0 %v55
    %1247 = vmatprep.subr.mxu0 %v60
    %1248 = vmatpush1.msra.mxu0 %v59
    %1249 = vmatprep.subr.mxu0 %v64
    %1250 = vmatpush1.msra.mxu0 %v63
    %1251 = vmatprep.subr.mxu0 %v68
    %1252 = vmatpush1.msra.mxu0 %v67
    %1253 = vmatprep.subr.mxu0 %v72
    %1254 = vmatpush1.msra.mxu0 %v71
    %1255 = vmatprep.subr.mxu0 %v76
    %1256 = vmatpush1.msra.mxu0 %v75
    %1257 = vmatprep.subr.mxu0 %v80
    %1258 = vmatpush1.msra.mxu0 %v79
    %1259 = vmatprep.subr.mxu0 %v84
    %1260 = vmatpush1.msra.mxu0 %v83
    %1261 = vmatprep.subr.mxu0 %v88
    %1262 = vmatpush1.msra.mxu0 %v87
    %1263 = vmatprep.subr.mxu0 %v92
    %1264 = vmatpush1.msra.mxu0 %v91
    %1265 = vmatprep.subr.mxu0 %v96
    %1266 = vmatpush1.msra.mxu0 %v95
    %1267 = vmatprep.subr.mxu0 %v100
    %1268 = vmatpush1.msra.mxu0 %v99
    %1269 = vmatprep.subr.mxu0 0.0
    %1270 = vmatpush1.msra.mxu0 0.0
    %1271 = vmatprep.subr.mxu0 0.0
    %1272 = vmatpush1.msra.mxu0 0.0
    %1273 = vmatprep.subr.mxu0 0.0
    %1274 = vmatpush1.msra.mxu0 0.0
    %1275 = vmatprep.subr.mxu0 0.0
    %1276 = vmatpush1.msra.mxu0 0.0
    %1277 = vmatprep.subr.mxu0 0.0
    %1278 = vmatpush1.msra.mxu0 0.0
    %1279 = vmatprep.subr.mxu0 0.0
    %1280 = vmatpush1.msra.mxu0 0.0
    %1281 = vmatprep.subr.mxu0 0.0
    %1282 = vmatpush1.msra.mxu0 0.0
    %1283 = vmatprep.subr.mxu0 0.0
    %1284 = vmatpush1.msra.mxu0 0.0
    %1285 = vmatprep.subr.mxu0 0.0
    %1286 = vmatpush1.msra.mxu0 0.0
    %1287 = vmatprep.subr.mxu0 0.0
    %1288 = vmatpush1.msra.mxu0 0.0
    %1289 = vmatprep.subr.mxu0 0.0
    %1290 = vmatpush1.msra.mxu0 0.0
    %1291 = vmatprep.subr.mxu0 0.0
    %1292 = vmatpush1.msra.mxu0 0.0
    %1293 = vmatprep.subr.mxu0 0.0
    %1294 = vmatpush1.msra.mxu0 0.0
    %1295 = vmatprep.subr.mxu0 0.0
    %1296 = vmatpush1.msra.mxu0 0.0
    %1297 = vmatprep.subr.mxu0 0.0
    %1298 = vmatpush1.msra.mxu0 0.0
    %1299 = vmatprep.subr.mxu0 0.0
    %1300 = vmatpush1.msra.mxu0 0.0
    %1301 = vmatprep.mubr.f32.mxu0 0.0
    %1302 = vmatmul.mubr.f32.gmra.mrb[0].mxu0 %v1158
    %v1303 = vpop.f32.mrb[0].mxu0
    %v1304 = vadd.f32 0.0, %v1303
    %v1305 = vpop.f32.mrb[0].mxu0
    %v1306 = vadd.f32 0.0, %v1305
    %1307 = vdwg.mxu0
    %v1308 = vadd.f32 %v1162, %v1233
    %v1309 = vadd.f32 %v1163, %v1235
    %v1310 = vadd.f32 %v1164, %v1304
    %v1311 = vadd.f32 %v1165, %v1306
    %v1312 = vxor.u32 %v1308, 2147483648
    %v1313 = vmul.f32 %v1312, 1.442695
    %v1314 = vpow.pop %v1313
    %v1315 = vadd.f32 %v1314, 1.0
    %v1316 = vrcp.pop %v1315
    %v1317 = vmul.f32 1.0, %v1316
    %v1318 = vxor.u32 %v1309, 2147483648
    %v1319 = vmul.f32 %v1318, 1.442695
    %v1320 = vpow.pop %v1319
    %v1321 = vadd.f32 %v1320, 1.0
    %v1322 = vrcp.pop %v1321
    %v1323 = vmul.f32 1.0, %v1322
    %v1324 = vtanh.pop %v1310
    %v1325 = vxor.u32 %v1311, 2147483648
    %v1326 = vmul.f32 %v1325, 1.442695
    %v1327 = vpow.pop %v1326
    %v1328 = vadd.f32 %v1327, 1.0
    %v1329 = vrcp.pop %v1328
    %v1330 = vmul.f32 1.0, %v1329
    %v1331 = vmul.f32 %v1323, %v1156
    %v1332 = vmul.f32 %v1317, %v1324
    %v1333 = vadd.f32 %v1331, %v1332
    %v1334 = vtanh.pop %v1333
    %v1335 = vmul.f32 %v1330, %v1334
    %s1336 = scalar_lea.vmem [#allocation2], 48
    %1337 = vst [vmem:[%s1336] sm:$0xff] %v1335
    %s1338 = scalar_lea.vmem %s0, 224
    %v1339 = vld [vmem:[%s1338] sm:$0xff]
    %v1340 = vld [vmem:[%s1338 + $0x8] sm:$0xff]
    %v1341 = vld [vmem:[%s1338 + $0x10] sm:$0xff]
    %v1342 = vld [vmem:[%s1338 + $0x18] sm:$0xff]
    %1343 = vmatprep.subr.mxu0 %v38
    %1344 = vmatpush1.msra.mxu0 %v37
    %1345 = vmatprep.subr.mxu0 %v42
    %1346 = vmatpush1.msra.mxu0 %v41
    %1347 = vmatprep.subr.mxu0 %v46
    %1348 = vmatpush1.msra.mxu0 %v45
    %1349 = vmatprep.subr.mxu0 %v50
    %1350 = vmatpush1.msra.mxu0 %v49
    %1351 = vmatprep.subr.mxu0 %v54
    %1352 = vmatpush1.msra.mxu0 %v53
    %1353 = vmatprep.subr.mxu0 %v58
    %1354 = vmatpush1.msra.mxu0 %v57
    %1355 = vmatprep.subr.mxu0 %v62
    %1356 = vmatpush1.msra.mxu0 %v61
    %1357 = vmatprep.subr.mxu0 %v66
    %1358 = vmatpush1.msra.mxu0 %v65
    %1359 = vmatprep.subr.mxu0 %v70
    %1360 = vmatpush1.msra.mxu0 %v69
    %1361 = vmatprep.subr.mxu0 %v74
    %1362 = vmatpush1.msra.mxu0 %v73
    %1363 = vmatprep.subr.mxu0 %v78
    %1364 = vmatpush1.msra.mxu0 %v77
    %1365 = vmatprep.subr.mxu0 %v82
    %1366 = vmatpush1.msra.mxu0 %v81
    %1367 = vmatprep.subr.mxu0 %v86
    %1368 = vmatpush1.msra.mxu0 %v85
    %1369 = vmatprep.subr.mxu0 %v90
    %1370 = vmatpush1.msra.mxu0 %v89
    %1371 = vmatprep.subr.mxu0 %v94
    %1372 = vmatpush1.msra.mxu0 %v93
    %1373 = vmatprep.subr.mxu0 %v98
    %1374 = vmatpush1.msra.mxu0 %v97
    %1375 = vmatprep.subr.mxu0 0.0
    %1376 = vmatpush1.msra.mxu0 0.0
    %1377 = vmatprep.subr.mxu0 0.0
    %1378 = vmatpush1.msra.mxu0 0.0
    %1379 = vmatprep.subr.mxu0 0.0
    %1380 = vmatpush1.msra.mxu0 0.0
    %1381 = vmatprep.subr.mxu0 0.0
    %1382 = vmatpush1.msra.mxu0 0.0
    %1383 = vmatprep.subr.mxu0 0.0
    %1384 = vmatpush1.msra.mxu0 0.0
    %1385 = vmatprep.subr.mxu0 0.0
    %1386 = vmatpush1.msra.mxu0 0.0
    %1387 = vmatprep.subr.mxu0 0.0
    %1388 = vmatpush1.msra.mxu0 0.0
    %1389 = vmatprep.subr.mxu0 0.0
    %1390 = vmatpush1.msra.mxu0 0.0
    %1391 = vmatprep.subr.mxu0 0.0
    %1392 = vmatpush1.msra.mxu0 0.0
    %1393 = vmatprep.subr.mxu0 0.0
    %1394 = vmatpush1.msra.mxu0 0.0
    %1395 = vmatprep.subr.mxu0 0.0
    %1396 = vmatpush1.msra.mxu0 0.0
    %1397 = vmatprep.subr.mxu0 0.0
    %1398 = vmatpush1.msra.mxu0 0.0
    %1399 = vmatprep.subr.mxu0 0.0
    %1400 = vmatpush1.msra.mxu0 0.0
    %1401 = vmatprep.subr.mxu0 0.0
    %1402 = vmatpush1.msra.mxu0 0.0
    %1403 = vmatprep.subr.mxu0 0.0
    %1404 = vmatpush1.msra.mxu0 0.0
    %1405 = vmatprep.subr.mxu0 0.0
    %1406 = vmatpush1.msra.mxu0 0.0
    %1407 = vmatprep.mubr.f32.mxu0 0.0
    %1408 = vmatmul.mubr.f32.gmra.mrb[0].mxu0 %v1335
    %v1409 = vpop.f32.mrb[0].mxu0
    %v1410 = vadd.f32 0.0, %v1409
    %v1411 = vpop.f32.mrb[0].mxu0
    %v1412 = vadd.f32 0.0, %v1411
    %1413 = vdwg.mxu0
    %1414 = vmatprep.subr.mxu0 %v40
    %1415 = vmatpush1.msra.mxu0 %v39
    %1416 = vmatprep.subr.mxu0 %v44
    %1417 = vmatpush1.msra.mxu0 %v43
    %1418 = vmatprep.subr.mxu0 %v48
    %1419 = vmatpush1.msra.mxu0 %v47
    %1420 = vmatprep.subr.mxu0 %v52
    %1421 = vmatpush1.msra.mxu0 %v51
    %1422 = vmatprep.subr.mxu0 %v56
    %1423 = vmatpush1.msra.mxu0 %v55
    %1424 = vmatprep.subr.mxu0 %v60
    %1425 = vmatpush1.msra.mxu0 %v59
    %1426 = vmatprep.subr.mxu0 %v64
    %1427 = vmatpush1.msra.mxu0 %v63
    %1428 = vmatprep.subr.mxu0 %v68
    %1429 = vmatpush1.msra.mxu0 %v67
    %1430 = vmatprep.subr.mxu0 %v72
    %1431 = vmatpush1.msra.mxu0 %v71
    %1432 = vmatprep.subr.mxu0 %v76
    %1433 = vmatpush1.msra.mxu0 %v75
    %1434 = vmatprep.subr.mxu0 %v80
    %1435 = vmatpush1.msra.mxu0 %v79
    %1436 = vmatprep.subr.mxu0 %v84
    %1437 = vmatpush1.msra.mxu0 %v83
    %1438 = vmatprep.subr.mxu0 %v88
    %1439 = vmatpush1.msra.mxu0 %v87
    %1440 = vmatprep.subr.mxu0 %v92
    %1441 = vmatpush1.msra.mxu0 %v91
    %1442 = vmatprep.subr.mxu0 %v96
    %1443 = vmatpush1.msra.mxu0 %v95
    %1444 = vmatprep.subr.mxu0 %v100
    %1445 = vmatpush1.msra.mxu0 %v99
    %1446 = vmatprep.subr.mxu0 0.0
    %1447 = vmatpush1.msra.mxu0 0.0
    %1448 = vmatprep.subr.mxu0 0.0
    %1449 = vmatpush1.msra.mxu0 0.0
    %1450 = vmatprep.subr.mxu0 0.0
    %1451 = vmatpush1.msra.mxu0 0.0
    %1452 = vmatprep.subr.mxu0 0.0
    %1453 = vmatpush1.msra.mxu0 0.0
    %1454 = vmatprep.subr.mxu0 0.0
    %1455 = vmatpush1.msra.mxu0 0.0
    %1456 = vmatprep.subr.mxu0 0.0
    %1457 = vmatpush1.msra.mxu0 0.0
    %1458 = vmatprep.subr.mxu0 0.0
    %1459 = vmatpush1.msra.mxu0 0.0
    %1460 = vmatprep.subr.mxu0 0.0
    %1461 = vmatpush1.msra.mxu0 0.0
    %1462 = vmatprep.subr.mxu0 0.0
    %1463 = vmatpush1.msra.mxu0 0.0
    %1464 = vmatprep.subr.mxu0 0.0
    %1465 = vmatpush1.msra.mxu0 0.0
    %1466 = vmatprep.subr.mxu0 0.0
    %1467 = vmatpush1.msra.mxu0 0.0
    %1468 = vmatprep.subr.mxu0 0.0
    %1469 = vmatpush1.msra.mxu0 0.0
    %1470 = vmatprep.subr.mxu0 0.0
    %1471 = vmatpush1.msra.mxu0 0.0
    %1472 = vmatprep.subr.mxu0 0.0
    %1473 = vmatpush1.msra.mxu0 0.0
    %1474 = vmatprep.subr.mxu0 0.0
    %1475 = vmatpush1.msra.mxu0 0.0
    %1476 = vmatprep.subr.mxu0 0.0
    %1477 = vmatpush1.msra.mxu0 0.0
    %1478 = vmatprep.mubr.f32.mxu0 0.0
    %1479 = vmatmul.mubr.f32.gmra.mrb[0].mxu0 %v1335
    %v1480 = vpop.f32.mrb[0].mxu0
    %v1481 = vadd.f32 0.0, %v1480
    %v1482 = vpop.f32.mrb[0].mxu0
    %v1483 = vadd.f32 0.0, %v1482
    %1484 = vdwg.mxu0
    %v1485 = vadd.f32 %v1339, %v1410
    %v1486 = vadd.f32 %v1340, %v1412
    %v1487 = vadd.f32 %v1341, %v1481
    %v1488 = vadd.f32 %v1342, %v1483
    %v1489 = vxor.u32 %v1485, 2147483648
    %v1490 = vmul.f32 %v1489, 1.442695
    %v1491 = vpow.pop %v1490
    %v1492 = vadd.f32 %v1491, 1.0
    %v1493 = vrcp.pop %v1492
    %v1494 = vmul.f32 1.0, %v1493
    %v1495 = vxor.u32 %v1486, 2147483648
    %v1496 = vmul.f32 %v1495, 1.442695
    %v1497 = vpow.pop %v1496
    %v1498 = vadd.f32 %v1497, 1.0
    %v1499 = vrcp.pop %v1498
    %v1500 = vmul.f32 1.0, %v1499
    %v1501 = vtanh.pop %v1487
    %v1502 = vxor.u32 %v1488, 2147483648
    %v1503 = vmul.f32 %v1502, 1.442695
    %v1504 = vpow.pop %v1503
    %v1505 = vadd.f32 %v1504, 1.0
    %v1506 = vrcp.pop %v1505
    %v1507 = vmul.f32 1.0, %v1506
    %v1508 = vmul.f32 %v1500, %v1333
    %v1509 = vmul.f32 %v1494, %v1501
    %v1510 = vadd.f32 %v1508, %v1509
    %v1511 = vtanh.pop %v1510
    %v1512 = vmul.f32 %v1507, %v1511
    %s1513 = scalar_lea.vmem [#allocation2], 56
    %1514 = vst [vmem:[%s1513] sm:$0xff] %v1512
    %v1515 = vld [vmem:[#allocation2] sm:$0xff]
    %v1516 = vld [vmem:[#allocation2 + $0x8] sm:$0xff]
    %v1517 = vld [vmem:[#allocation2 + $0x10] sm:$0xff]
    %v1518 = vld [vmem:[#allocation2 + $0x18] sm:$0xff]
    %v1519 = vld [vmem:[#allocation2 + $0x20] sm:$0xff]
    %v1520 = vld [vmem:[#allocation2 + $0x28] sm:$0xff]
    %v1521 = vld [vmem:[#allocation2 + $0x30] sm:$0xff]
    %v1522 = vld [vmem:[#allocation2 + $0x38] sm:$0xff]
    %v1523 = vld [vmem:[%s2] sm:$0xff]
    %v1524 = vld [vmem:[%s2 + $0x8] sm:$0xff]
    %v1525 = vld [vmem:[%s2 + $0x10] sm:$0xff]
    %v1526 = vld [vmem:[%s2 + $0x18] sm:$0xff]
    %v1527 = vld [vmem:[%s2 + $0x20] sm:$0xff]
    %v1528 = vld [vmem:[%s2 + $0x28] sm:$0xff]
    %v1529 = vld [vmem:[%s2 + $0x30] sm:$0xff]
    %v1530 = vld [vmem:[%s2 + $0x38] sm:$0xff]
    %v1531 = vld [vmem:[%s2 + $0x40] sm:$0xff]
    %v1532 = vld [vmem:[%s2 + $0x48] sm:$0xff]
    %v1533 = vld [vmem:[%s2 + $0x50] sm:$0xff]
    %v1534 = vld [vmem:[%s2 + $0x58] sm:$0xff]
    %v1535 = vld [vmem:[%s2 + $0x60] sm:$0xff]
    %v1536 = vld [vmem:[%s2 + $0x68] sm:$0xff]
    %v1537 = vld [vmem:[%s2 + $0x70] sm:$0xff]
    %v1538 = vld [vmem:[%s2 + $0x78] sm:$0xff]
    %v1539 = vld [vmem:[%s3] sm:$0x1]
    %v1541 = vlaneseq
    %v1542 = vshrl.u32 %v1541, 7
    %v1543 = vsub.s32 0, %v1542
    %v1544 = vrot.slane %v1539, %v1543
    %1546 = vmatprep.subr.mxu0 0.0
    %1547 = vmatpush1.msra.mxu0 %v1523
    %1548 = vmatprep.subr.mxu0 0.0
    %1549 = vmatpush1.msra.mxu0 %v1524
    %1550 = vmatprep.subr.mxu0 0.0
    %1551 = vmatpush1.msra.mxu0 %v1525
    %1552 = vmatprep.subr.mxu0 0.0
    %1553 = vmatpush1.msra.mxu0 %v1526
    %1554 = vmatprep.subr.mxu0 0.0
    %1555 = vmatpush1.msra.mxu0 %v1527
    %1556 = vmatprep.subr.mxu0 0.0
    %1557 = vmatpush1.msra.mxu0 %v1528
    %1558 = vmatprep.subr.mxu0 0.0
    %1559 = vmatpush1.msra.mxu0 %v1529
    %1560 = vmatprep.subr.mxu0 0.0
    %1561 = vmatpush1.msra.mxu0 %v1530
    %1562 = vmatprep.subr.mxu0 0.0
    %1563 = vmatpush1.msra.mxu0 %v1531
    %1564 = vmatprep.subr.mxu0 0.0
    %1565 = vmatpush1.msra.mxu0 %v1532
    %1566 = vmatprep.subr.mxu0 0.0
    %1567 = vmatpush1.msra.mxu0 %v1533
    %1568 = vmatprep.subr.mxu0 0.0
    %1569 = vmatpush1.msra.mxu0 %v1534
    %1570 = vmatprep.subr.mxu0 0.0
    %1571 = vmatpush1.msra.mxu0 %v1535
    %1572 = vmatprep.subr.mxu0 0.0
    %1573 = vmatpush1.msra.mxu0 %v1536
    %1574 = vmatprep.subr.mxu0 0.0
    %1575 = vmatpush1.msra.mxu0 %v1537
    %1576 = vmatprep.subr.mxu0 0.0
    %1577 = vmatpush1.msra.mxu0 %v1538
    %1578 = vmatprep.subr.mxu0 0.0
    %1579 = vmatpush1.msra.mxu0 0.0
    %1580 = vmatprep.subr.mxu0 0.0
    %1581 = vmatpush1.msra.mxu0 0.0
    %1582 = vmatprep.subr.mxu0 0.0
    %1583 = vmatpush1.msra.mxu0 0.0
    %1584 = vmatprep.subr.mxu0 0.0
    %1585 = vmatpush1.msra.mxu0 0.0
    %1586 = vmatprep.subr.mxu0 0.0
    %1587 = vmatpush1.msra.mxu0 0.0
    %1588 = vmatprep.subr.mxu0 0.0
    %1589 = vmatpush1.msra.mxu0 0.0
    %1590 = vmatprep.subr.mxu0 0.0
    %1591 = vmatpush1.msra.mxu0 0.0
    %1592 = vmatprep.subr.mxu0 0.0
    %1593 = vmatpush1.msra.mxu0 0.0
    %1594 = vmatprep.subr.mxu0 0.0
    %1595 = vmatpush1.msra.mxu0 0.0
    %1596 = vmatprep.subr.mxu0 0.0
    %1597 = vmatpush1.msra.mxu0 0.0
    %1598 = vmatprep.subr.mxu0 0.0
    %1599 = vmatpush1.msra.mxu0 0.0
    %1600 = vmatprep.subr.mxu0 0.0
    %1601 = vmatpush1.msra.mxu0 0.0
    %1602 = vmatprep.subr.mxu0 0.0
    %1603 = vmatpush1.msra.mxu0 0.0
    %1604 = vmatprep.subr.mxu0 0.0
    %1605 = vmatpush1.msra.mxu0 0.0
    %1606 = vmatprep.subr.mxu0 0.0
    %1607 = vmatpush1.msra.mxu0 0.0
    %1608 = vmatprep.subr.mxu0 0.0
    %1609 = vmatpush1.msra.mxu0 0.0
    %1610 = vmatprep.mubr.f32.mxu0 0.0
    %1611 = vmatmul.mubr.f32.gmra.mrb[0].mxu0 %v1515
    %v1612 = vpop.f32.mrb[0].mxu0
    %v1613 = vadd.f32 %v1544, %v1612
    %v1614 = vpop.f32.mrb[0].mxu0
    %1615 = vmatprep.mubr.f32.mxu0 0.0
    %1616 = vmatmul.mubr.f32.gmra.mrb[0].mxu0 %v1516
    %v1617 = vpop.f32.mrb[0].mxu0
    %v1618 = vadd.f32 %v1544, %v1617
    %v1619 = vpop.f32.mrb[0].mxu0
    %1620 = vmatprep.mubr.f32.mxu0 0.0
    %1621 = vmatmul.mubr.f32.gmra.mrb[0].mxu0 %v1517
    %v1622 = vpop.f32.mrb[0].mxu0
    %v1623 = vadd.f32 %v1544, %v1622
    %v1624 = vpop.f32.mrb[0].mxu0
    %1625 = vmatprep.mubr.f32.mxu0 0.0
    %1626 = vmatmul.mubr.f32.gmra.mrb[0].mxu0 %v1518
    %v1627 = vpop.f32.mrb[0].mxu0
    %v1628 = vadd.f32 %v1544, %v1627
    %v1629 = vpop.f32.mrb[0].mxu0
    %1630 = vmatprep.mubr.f32.mxu0 0.0
    %1631 = vmatmul.mubr.f32.gmra.mrb[0].mxu0 %v1519
    %v1632 = vpop.f32.mrb[0].mxu0
    %v1633 = vadd.f32 %v1544, %v1632
    %v1634 = vpop.f32.mrb[0].mxu0
    %1635 = vmatprep.mubr.f32.mxu0 0.0
    %1636 = vmatmul.mubr.f32.gmra.mrb[0].mxu0 %v1520
    %v1637 = vpop.f32.mrb[0].mxu0
    %v1638 = vadd.f32 %v1544, %v1637
    %v1639 = vpop.f32.mrb[0].mxu0
    %1640 = vmatprep.mubr.f32.mxu0 0.0
    %1641 = vmatmul.mubr.f32.gmra.mrb[0].mxu0 %v1521
    %v1642 = vpop.f32.mrb[0].mxu0
    %v1643 = vadd.f32 %v1544, %v1642
    %v1644 = vpop.f32.mrb[0].mxu0
    %1645 = vmatprep.mubr.f32.mxu0 0.0
    %1646 = vmatmul.mubr.f32.gmra.mrb[0].mxu0 %v1522
    %v1647 = vpop.f32.mrb[0].mxu0
    %v1648 = vadd.f32 %v1544, %v1647
    %v1649 = vpop.f32.mrb[0].mxu0
    %1650 = vdwg.mxu0
    %v1651 = vtanh.pop %v1613
    %v1652 = vtanh.pop %v1618
    %v1653 = vtanh.pop %v1623
    %v1654 = vtanh.pop %v1628
    %v1655 = vtanh.pop %v1633
    %v1656 = vtanh.pop %v1638
    %v1657 = vtanh.pop %v1643
    %v1658 = vtanh.pop %v1648
    %v1659 = vld [vmem:[%s4] sm:$0xff]
    %v1660 = vld [vmem:[%s4 + $0x8] sm:$0xff]
    %v1661 = vld [vmem:[%s4 + $0x10] sm:$0xff]
    %v1662 = vld [vmem:[%s4 + $0x18] sm:$0xff]
    %v1663 = vld [vmem:[%s4 + $0x20] sm:$0xff]
    %v1664 = vld [vmem:[%s4 + $0x28] sm:$0xff]
    %v1665 = vld [vmem:[%s4 + $0x30] sm:$0xff]
    %v1666 = vld [vmem:[%s4 + $0x38] sm:$0xff]
    %v1667 = vld [vmem:[%s4 + $0x40] sm:$0xff]
    %v1668 = vld [vmem:[%s4 + $0x48] sm:$0xff]
    %v1669 = vld [vmem:[%s4 + $0x50] sm:$0xff]
    %v1670 = vld [vmem:[%s4 + $0x58] sm:$0xff]
    %v1671 = vld [vmem:[%s4 + $0x60] sm:$0xff]
    %v1672 = vld [vmem:[%s4 + $0x68] sm:$0xff]
    %v1673 = vld [vmem:[%s4 + $0x70] sm:$0xff]
    %v1674 = vld [vmem:[%s4 + $0x78] sm:$0xff]
    %v1675 = vld [vmem:[%s5] sm:$0x1]
    %v1677 = vlaneseq
    %v1678 = vshrl.u32 %v1677, 7
    %v1679 = vsub.s32 0, %v1678
    %v1680 = vrot.slane %v1675, %v1679
    %1682 = vmatprep.subr.mxu0 0.0
    %1683 = vmatpush1.msra.mxu0 %v1659
    %1684 = vmatprep.subr.mxu0 0.0
    %1685 = vmatpush1.msra.mxu0 %v1660
    %1686 = vmatprep.subr.mxu0 0.0
    %1687 = vmatpush1.msra.mxu0 %v1661
    %1688 = vmatprep.subr.mxu0 0.0
    %1689 = vmatpush1.msra.mxu0 %v1662
    %1690 = vmatprep.subr.mxu0 0.0
    %1691 = vmatpush1.msra.mxu0 %v1663
    %1692 = vmatprep.subr.mxu0 0.0
    %1693 = vmatpush1.msra.mxu0 %v1664
    %1694 = vmatprep.subr.mxu0 0.0
    %1695 = vmatpush1.msra.mxu0 %v1665
    %1696 = vmatprep.subr.mxu0 0.0
    %1697 = vmatpush1.msra.mxu0 %v1666
    %1698 = vmatprep.subr.mxu0 0.0
    %1699 = vmatpush1.msra.mxu0 %v1667
    %1700 = vmatprep.subr.mxu0 0.0
    %1701 = vmatpush1.msra.mxu0 %v1668
    %1702 = vmatprep.subr.mxu0 0.0
    %1703 = vmatpush1.msra.mxu0 %v1669
    %1704 = vmatprep.subr.mxu0 0.0
    %1705 = vmatpush1.msra.mxu0 %v1670
    %1706 = vmatprep.subr.mxu0 0.0
    %1707 = vmatpush1.msra.mxu0 %v1671
    %1708 = vmatprep.subr.mxu0 0.0
    %1709 = vmatpush1.msra.mxu0 %v1672
    %1710 = vmatprep.subr.mxu0 0.0
    %1711 = vmatpush1.msra.mxu0 %v1673
    %1712 = vmatprep.subr.mxu0 0.0
    %1713 = vmatpush1.msra.mxu0 %v1674
    %1714 = vmatprep.subr.mxu0 0.0
    %1715 = vmatpush1.msra.mxu0 0.0
    %1716 = vmatprep.subr.mxu0 0.0
    %1717 = vmatpush1.msra.mxu0 0.0
    %1718 = vmatprep.subr.mxu0 0.0
    %1719 = vmatpush1.msra.mxu0 0.0
    %1720 = vmatprep.subr.mxu0 0.0
    %1721 = vmatpush1.msra.mxu0 0.0
    %1722 = vmatprep.subr.mxu0 0.0
    %1723 = vmatpush1.msra.mxu0 0.0
    %1724 = vmatprep.subr.mxu0 0.0
    %1725 = vmatpush1.msra.mxu0 0.0
    %1726 = vmatprep.subr.mxu0 0.0
    %1727 = vmatpush1.msra.mxu0 0.0
    %1728 = vmatprep.subr.mxu0 0.0
    %1729 = vmatpush1.msra.mxu0 0.0
    %1730 = vmatprep.subr.mxu0 0.0
    %1731 = vmatpush1.msra.mxu0 0.0
    %1732 = vmatprep.subr.mxu0 0.0
    %1733 = vmatpush1.msra.mxu0 0.0
    %1734 = vmatprep.subr.mxu0 0.0
    %1735 = vmatpush1.msra.mxu0 0.0
    %1736 = vmatprep.subr.mxu0 0.0
    %1737 = vmatpush1.msra.mxu0 0.0
    %1738 = vmatprep.subr.mxu0 0.0
    %1739 = vmatpush1.msra.mxu0 0.0
    %1740 = vmatprep.subr.mxu0 0.0
    %1741 = vmatpush1.msra.mxu0 0.0
    %1742 = vmatprep.subr.mxu0 0.0
    %1743 = vmatpush1.msra.mxu0 0.0
    %1744 = vmatprep.subr.mxu0 0.0
    %1745 = vmatpush1.msra.mxu0 0.0
    %1746 = vmatprep.mubr.f32.mxu0 0.0
    %1747 = vmatmul.mubr.f32.gmra.mrb[0].mxu0 %v1651
    %v1748 = vpop.f32.mrb[0].mxu0
    %v1749 = vadd.f32 %v1680, %v1748
    %v1750 = vpop.f32.mrb[0].mxu0
    %1751 = vmatprep.mubr.f32.mxu0 0.0
    %1752 = vmatmul.mubr.f32.gmra.mrb[0].mxu0 %v1652
    %v1753 = vpop.f32.mrb[0].mxu0
    %v1754 = vadd.f32 %v1680, %v1753
    %v1755 = vpop.f32.mrb[0].mxu0
    %1756 = vmatprep.mubr.f32.mxu0 0.0
    %1757 = vmatmul.mubr.f32.gmra.mrb[0].mxu0 %v1653
    %v1758 = vpop.f32.mrb[0].mxu0
    %v1759 = vadd.f32 %v1680, %v1758
    %v1760 = vpop.f32.mrb[0].mxu0
    %1761 = vmatprep.mubr.f32.mxu0 0.0
    %1762 = vmatmul.mubr.f32.gmra.mrb[0].mxu0 %v1654
    %v1763 = vpop.f32.mrb[0].mxu0
    %v1764 = vadd.f32 %v1680, %v1763
    %v1765 = vpop.f32.mrb[0].mxu0
    %1766 = vmatprep.mubr.f32.mxu0 0.0
    %1767 = vmatmul.mubr.f32.gmra.mrb[0].mxu0 %v1655
    %v1768 = vpop.f32.mrb[0].mxu0
    %v1769 = vadd.f32 %v1680, %v1768
    %v1770 = vpop.f32.mrb[0].mxu0
    %1771 = vmatprep.mubr.f32.mxu0 0.0
    %1772 = vmatmul.mubr.f32.gmra.mrb[0].mxu0 %v1656
    %v1773 = vpop.f32.mrb[0].mxu0
    %v1774 = vadd.f32 %v1680, %v1773
    %v1775 = vpop.f32.mrb[0].mxu0
    %1776 = vmatprep.mubr.f32.mxu0 0.0
    %1777 = vmatmul.mubr.f32.gmra.mrb[0].mxu0 %v1657
    %v1778 = vpop.f32.mrb[0].mxu0
    %v1779 = vadd.f32 %v1680, %v1778
    %v1780 = vpop.f32.mrb[0].mxu0
    %1781 = vmatprep.mubr.f32.mxu0 0.0
    %1782 = vmatmul.mubr.f32.gmra.mrb[0].mxu0 %v1658
    %v1783 = vpop.f32.mrb[0].mxu0
    %v1784 = vadd.f32 %v1680, %v1783
    %v1785 = vpop.f32.mrb[0].mxu0
    %1786 = vdwg.mxu0
    %1787 = vmax.xlane.f32.xlu0 %v1749
    %v1788 = vpop.xlane.xlu0 %1787
    %1789 = vmax.xlane.f32.xlu0 %v1754
    %v1790 = vpop.xlane.xlu0 %1789
    %1791 = vmax.xlane.f32.xlu0 %v1759
    %v1792 = vpop.xlane.xlu0 %1791
    %1793 = vmax.xlane.f32.xlu0 %v1764
    %v1794 = vpop.xlane.xlu0 %1793
    %1795 = vmax.xlane.f32.xlu0 %v1769
    %v1796 = vpop.xlane.xlu0 %1795
    %1797 = vmax.xlane.f32.xlu0 %v1774
    %v1798 = vpop.xlane.xlu0 %1797
    %1799 = vmax.xlane.f32.xlu0 %v1779
    %v1800 = vpop.xlane.xlu0 %1799
    %1801 = vmax.xlane.f32.xlu0 %v1784
    %v1802 = vpop.xlane.xlu0 %1801
    %v1803 = vsub.f32 %v1749, %v1788
    %v1804 = vsub.f32 %v1754, %v1790
    %v1805 = vsub.f32 %v1759, %v1792
    %v1806 = vsub.f32 %v1764, %v1794
    %v1807 = vsub.f32 %v1769, %v1796
    %v1808 = vsub.f32 %v1774, %v1798
    %v1809 = vsub.f32 %v1779, %v1800
    %v1810 = vsub.f32 %v1784, %v1802
    %v1811 = vmul.f32 %v1803, 1.442695
    %v1812 = vpow.pop %v1811
    %v1813 = vmul.f32 %v1804, 1.442695
    %v1814 = vpow.pop %v1813
    %v1815 = vmul.f32 %v1805, 1.442695
    %v1816 = vpow.pop %v1815
    %v1817 = vmul.f32 %v1806, 1.442695
    %v1818 = vpow.pop %v1817
    %v1819 = vmul.f32 %v1807, 1.442695
    %v1820 = vpow.pop %v1819
    %v1821 = vmul.f32 %v1808, 1.442695
    %v1822 = vpow.pop %v1821
    %v1823 = vmul.f32 %v1809, 1.442695
    %v1824 = vpow.pop %v1823
    %v1825 = vmul.f32 %v1810, 1.442695
    %v1826 = vpow.pop %v1825
    %1827 = vadd.xlane.f32.xlu0 %v1812
    %v1828 = vpop.xlane.xlu0 %1827
    %1829 = vadd.xlane.f32.xlu0 %v1814
    %v1830 = vpop.xlane.xlu0 %1829
    %1831 = vadd.xlane.f32.xlu0 %v1816
    %v1832 = vpop.xlane.xlu0 %1831
    %1833 = vadd.xlane.f32.xlu0 %v1818
    %v1834 = vpop.xlane.xlu0 %1833
    %1835 = vadd.xlane.f32.xlu0 %v1820
    %v1836 = vpop.xlane.xlu0 %1835
    %1837 = vadd.xlane.f32.xlu0 %v1822
    %v1838 = vpop.xlane.xlu0 %1837
    %1839 = vadd.xlane.f32.xlu0 %v1824
    %v1840 = vpop.xlane.xlu0 %1839
    %1841 = vadd.xlane.f32.xlu0 %v1826
    %v1842 = vpop.xlane.xlu0 %1841
    %v1843 = vlog2.pop %v1828
    %v1844 = vmul.f32 %v1843, 0.6931472
    %v1845 = vlog2.pop %v1830
    %v1846 = vmul.f32 %v1845, 0.6931472
    %v1847 = vlog2.pop %v1832
    %v1848 = vmul.f32 %v1847, 0.6931472
    %v1849 = vlog2.pop %v1834
    %v1850 = vmul.f32 %v1849, 0.6931472
    %v1851 = vlog2.pop %v1836
    %v1852 = vmul.f32 %v1851, 0.6931472
    %v1853 = vlog2.pop %v1838
    %v1854 = vmul.f32 %v1853, 0.6931472
    %v1855 = vlog2.pop %v1840
    %v1856 = vmul.f32 %v1855, 0.6931472
    %v1857 = vlog2.pop %v1842
    %v1858 = vmul.f32 %v1857, 0.6931472
    %v1859 = vadd.f32 %v1788, %v1844
    %v1860 = vadd.f32 %v1790, %v1846
    %v1861 = vadd.f32 %v1792, %v1848
    %v1862 = vadd.f32 %v1794, %v1850
    %v1863 = vadd.f32 %v1796, %v1852
    %v1864 = vadd.f32 %v1798, %v1854
    %v1865 = vadd.f32 %v1800, %v1856
    %v1866 = vadd.f32 %v1802, %v1858
    %v1867 = vsub.f32 %v1749, %v1859
    %v1868 = vsub.f32 %v1754, %v1860
    %v1869 = vsub.f32 %v1759, %v1861
    %v1870 = vsub.f32 %v1764, %v1862
    %v1871 = vsub.f32 %v1769, %v1863
    %v1872 = vsub.f32 %v1774, %v1864
    %v1873 = vsub.f32 %v1779, %v1865
    %v1874 = vsub.f32 %v1784, %v1866
    %1875 = vst [vmem:[%s6] sm:$0xff] %v1867
    %1876 = vst [vmem:[%s6 + $0x8] sm:$0xff] %v1868
    %1877 = vst [vmem:[%s6 + $0x10] sm:$0xff] %v1869
    %1878 = vst [vmem:[%s6 + $0x18] sm:$0xff] %v1870
    %1879 = vst [vmem:[%s6 + $0x20] sm:$0xff] %v1871
    %1880 = vst [vmem:[%s6 + $0x28] sm:$0xff] %v1872
    %1881 = vst [vmem:[%s6 + $0x30] sm:$0xff] %v1873
    %1882 = vst [vmem:[%s6 + $0x38] sm:$0xff] %v1874
    // Predicated region
    $region30: #{stacked_rnn_forward.1} parent=1 // pred_check
      _
    $region31: #{stacked_rnn_forward.1} parent=1 // pred_check_branch
      %1884 = sbr.rel (0) target = $region33
    $region32: #{stacked_rnn_forward.1} parent=1 // pred_region
      _
    $region33: #{stacked_rnn_forward.1} parent=1 // pred_fallthru
      _
    // Predicated region
    $region34: #{stacked_rnn_forward.1} parent=1 // pred_check
      _
    $region35: #{stacked_rnn_forward.1} parent=1 // pred_check_branch
      %1886 = sbr.rel (0) target = $region37
    $region36: #{stacked_rnn_forward.1} parent=1 // pred_region
      _
    $region37: #{stacked_rnn_forward.1} parent=1 // pred_fallthru
      _
    %1887 = vsyncpa [#allocation4], 1

</llo_original>
